<compile_context>
chip_gen: v7x
topology: tpu7x:2x2x1
jax: 0.10.0
libtpu: 0.0.40
codegen_flags: <defaults>
</compile_context>

<pallas_src>
from functools import partial

import jax
import jax.numpy as jnp
from jax.experimental import pallas as pl
from jax.experimental.pallas import tpu as pltpu

BN_EPS = 1e-5


def _round_up(x, m):
    return ((x + m - 1) // m) * m


def _pad_to(x, shape):
    pads = [(0, t - s) for s, t in zip(x.shape, shape)]
    return jnp.pad(x, pads)


def _block_bytes(shape, itemsize):
    """Rough VMEM footprint of one block (lane/sublane padded)."""
    if len(shape) == 1:
        return itemsize * _round_up(shape[0], 128)
    lead = 1
    for d in shape[:-2]:
        lead *= d
    return itemsize * lead * _round_up(shape[-2], 8) * _round_up(shape[-1], 128)


def _vmem_capacity_bytes():
    try:
        cap = getattr(pltpu.get_tpu_info(), "vmem_capacity_bytes", None)
        if cap:
            return int(cap)
    except Exception:
        pass
    return 64 << 20  # conservative default (v7x per-core VMEM)


def _choose_tiling(B, S_pad, H, Dt_pad, L_pad, max_rows=1024):
    """Pick the batch tile TB and a vmem limit from the chip's actual VMEM capacity."""
    budget = min(int(0.75 * _vmem_capacity_bytes()), 100 << 20)

    def step_bytes(tb):
        # double-buffered per-step activation blocks (hs bf16, mask f32)
        act = 2 * (_block_bytes((tb, S_pad, H), 2) + _block_bytes((tb, S_pad, 1), 4))
        # weights (counted double-buffered; Buffered(1) only frees headroom)
        wgt = 2 * (_block_bytes((H, Dt_pad), 2) + _block_bytes((1, Dt_pad), 4)
                   + _block_bytes((H, L_pad), 2) + 2 * _block_bytes((Dt_pad, L_pad), 2)
                   + _block_bytes((1, L_pad), 4))
        # in-kernel f32 intermediates (tdl + masked copy) and the output block
        mid = 2 * tb * S_pad * _round_up(Dt_pad, 128) * 4
        out = 2 * _block_bytes((tb, L_pad), 4)
        return act + wgt + mid + out

    tb = max(1, min(B, max(1, max_rows // S_pad)))
    while tb > 1 and step_bytes(tb) > budget:
        tb -= 1
    if tb >= B:
        tb, b_pad = B, B                       # single grid step, block == full batch
    else:
        tb = max(8, (tb // 8) * 8)             # keep the (TB, L_pad) out block sublane-aligned
        b_pad = _round_up(B, tb)
    vmem_limit = int(min(max(step_bytes(tb) + (4 << 20), 32 << 20), budget))
    return tb, b_pad, vmem_limit


def meanmax_head_kernel(
    hs_ref,          # (TB, S_pad, H)   bf16  full sequence (token 0 excluded from pooling here)
    mask_ref,        # (TB, S_pad, 1)   f32   attention mask (pad rows already 0)
    w_tdl_ref,       # (H, Dt_pad)      bf16  TimeDistributed Linear weight (zero-padded cols)
    b_tdl_ref,       # (1, Dt_pad)      f32
    w_cls_out_ref,   # (H, L_pad)       bf16  fused cls chain: BN1 -> w_cls -> fc-BN -> w_fc[:H]
    w_fc_mean_ref,   # (Dt_pad, L_pad)  bf16  folded fc rows for the mean slice
    w_fc_max_ref,    # (Dt_pad, L_pad)  bf16  folded fc rows for the max slice
    b_fc_ref,        # (1, L_pad)       f32   folded fc bias (includes folded cls bias)
    out_ref,         # (TB, L_pad)      f32
):
    f32 = jnp.float32
    bf16 = jnp.bfloat16
    TB, S, H = hs_ref.shape
    Dt_pad = w_tdl_ref.shape[1]

    hs = hs_ref[...]                                                   # (TB, S, H) bf16

    # pooling mask: exclude token 0 in-kernel via an iota compare (no wrapper mask rewrite)
    pos = jax.lax.broadcasted_iota(jnp.int32, (S, 1), 0)               # (S, 1)
    m = mask_ref[...].astype(f32) * (pos > 0).astype(f32)              # (TB, S, 1)

    # ---- TimeDistributed Linear(H -> H-1) over every token (one big bf16 MXU matmul) ----
    hs2d = hs.reshape(TB * S, H)                                       # free: S % 16 == 0
    tdl2d = jnp.dot(hs2d, w_tdl_ref[...], preferred_element_type=f32) + b_tdl_ref[...]
    tdl = tdl2d.reshape(TB, S, Dt_pad)                                 # (TB, S, Dt_pad) f32

    # ---- masked mean pooling ----
    sum_emb = jnp.sum(tdl * m, axis=1)                                 # (TB, Dt_pad)
    sum_mask = jnp.maximum(jnp.sum(m, axis=1), 1e-9)                   # (TB, 1)
    mean_feat = sum_emb / sum_mask                                     # (TB, Dt_pad)

    # ---- masked max pooling (masked positions -> -1e4, as in the reference) ----
    max_feat = jnp.max(jnp.where(m > 0.0, tdl, f32(-1e4)), axis=1)     # (TB, Dt_pad)

    # ---- final output: fused cls matmul + two folded-fc matmuls + folded bias ----
    cls_tok = hs[:, 0, :]                                              # (TB, H) bf16
    out = jnp.dot(cls_tok, w_cls_out_ref[...], preferred_element_type=f32)
    out = out + jnp.dot(mean_feat.astype(bf16), w_fc_mean_ref[...],
                        preferred_element_type=f32)
    out = out + jnp.dot(max_feat.astype(bf16), w_fc_max_ref[...],
                        preferred_element_type=f32)
    out = out + b_fc_ref[...]                                          # (TB, L_pad)

    out_ref[...] = out


@partial(jax.jit, static_argnames=("weight_buffered",))
def _meanmax_head_impl(last_hidden_state, attention_mask, params, *, weight_buffered):
    f32, bf16 = jnp.float32, jnp.bfloat16
    B, S, H = last_hidden_state.shape
    num_labels = params["w_fc"].shape[1]
    Dt = H - 1
    Dt_pad = _round_up(Dt, 128)
    L_pad = _round_up(num_labels, 128)
    S_pad = _round_up(S, 16)            # bf16 sublane packing -> free in-kernel reshape
    TB, B_pad, vmem_limit = _choose_tiling(B, S_pad, H, Dt_pad, L_pad)
    grid = (B_pad // TB,)

    # ---- fold eval-mode BatchNorms into the linear weights ----
    cls_scale = params["cls_gamma"] * jax.lax.rsqrt(params["cls_rvar"] + BN_EPS)        # (1, H)
    w_cls_f = cls_scale.reshape(H, 1) * params["w_cls"]                                 # (H, H)
    b_cls_f = (params["cls_beta"] - params["cls_rmean"] * cls_scale) @ params["w_cls"]  # (1, H)

    fc_scale = params["fc_gamma"] * jax.lax.rsqrt(params["fc_rvar"] + BN_EPS)           # (1, 3H-2)
    w_fc_f = fc_scale.reshape(-1, 1) * params["w_fc"]                                   # (3H-2, L)
    b_fc_f = (params["fc_beta"] - params["fc_rmean"] * fc_scale) @ params["w_fc"]       # (1, L)

    w_fc_cls = w_fc_f[:H]
    w_fc_mean = w_fc_f[H:H + Dt]
    w_fc_max = w_fc_f[H + Dt:H + 2 * Dt]

    # ---- fuse the entire (affine) cls chain into one weight/bias: exact in eval mode ----
    w_cls_to_out = w_cls_f @ w_fc_cls                 # (H, L)
    b_total = b_cls_f @ w_fc_cls + b_fc_f             # (1, L)

    # ---- lane-pad, cast matmul operands to bf16 (biases stay f32) ----
    w_tdl_p = _pad_to(params["w_tdl"], (H, Dt_pad)).astype(bf16)
    b_tdl_p = _pad_to(params["b_tdl"], (1, Dt_pad)).astype(f32)
    w_cls_out_p = _pad_to(w_cls_to_out, (H, L_pad)).astype(bf16)
    w_fc_mean_p = _pad_to(w_fc_mean, (Dt_pad, L_pad)).astype(bf16)
    w_fc_max_p = _pad_to(w_fc_max, (Dt_pad, L_pad)).astype(bf16)
    b_total_p = _pad_to(b_total, (1, L_pad)).astype(f32)

    # ---- pad activations: S -> S_pad (pad rows get mask 0), B -> B_pad ----
    hs_p = _pad_to(last_hidden_state, (B_pad, S_pad, H)).astype(bf16)
    mask_p = _pad_to(attention_mask.astype(f32), (B_pad, S_pad, 1))

    def wspec(shape):
        # constant weight blocks: single-buffered when supported (halves their VMEM)
        if weight_buffered:
            return pl.BlockSpec(shape, lambda g: (0, 0), pipeline_mode=pl.Buffered(1))
        return pl.BlockSpec(shape, lambda g: (0, 0))

    in_specs = [
        pl.BlockSpec((TB, S_pad, H), lambda g: (g, 0, 0)),
        pl.BlockSpec((TB, S_pad, 1), lambda g: (g, 0, 0)),
        wspec((H, Dt_pad)),
        wspec((1, Dt_pad)),
        wspec((H, L_pad)),
        wspec((Dt_pad, L_pad)),
        wspec((Dt_pad, L_pad)),
        wspec((1, L_pad)),
    ]

    out_padded = pl.pallas_call(
        meanmax_head_kernel,
        out_shape=jax.ShapeDtypeStruct((B_pad, L_pad), f32),
        grid_spec=pltpu.PrefetchScalarGridSpec(
            num_scalar_prefetch=0,
            grid=grid,
            in_specs=in_specs,
            out_specs=pl.BlockSpec((TB, L_pad), lambda g: (g, 0)),
        ),
        compiler_params=pltpu.CompilerParams(
            dimension_semantics=("parallel",),
            vmem_limit_bytes=vmem_limit,
        ),
    )(
        hs_p, mask_p,
        w_tdl_p, b_tdl_p, w_cls_out_p, w_fc_mean_p, w_fc_max_p, b_total_p,
    )

    return out_padded[:B, :num_labels]


_WEIGHT_SINGLE_BUFFER = True


def meanmax_head(last_hidden_state, attention_mask, params):
    """Public entry point; falls back to default buffering if pl.Buffered(1) is rejected."""
    global _WEIGHT_SINGLE_BUFFER
    if _WEIGHT_SINGLE_BUFFER:
        try:
            return _meanmax_head_impl(last_hidden_state, attention_mask, params,
                                      weight_buffered=True)
        except Exception:
            _WEIGHT_SINGLE_BUFFER = False
    return _meanmax_head_impl(last_hidden_state, attention_mask, params,
                              weight_buffered=False)


def reference_jax(last_hidden_state, attention_mask, params):
    """Pure-JAX f32 reference mirroring the PyTorch forward (eval mode)."""
    hs = last_hidden_state.astype(jnp.float32)
    cls_tok = hs[:, 0, :]
    rest = hs[:, 1:, :]
    m = attention_mask[:, 1:, :].astype(jnp.float32)

    cls_bn = (cls_tok - params["cls_rmean"]) / jnp.sqrt(params["cls_rvar"] + BN_EPS)
    cls_bn = cls_bn * params["cls_gamma"] + params["cls_beta"]
    cls_out = cls_bn @ params["w_cls"]

    tdl = jnp.einsum("bsh,hd->bsd", rest, params["w_tdl"]) + params["b_tdl"]

    sum_emb = jnp.sum(tdl * m, axis=1)
    sum_mask = jnp.maximum(jnp.sum(m, axis=1), 1e-9)
    mean_feat = sum_emb / sum_mask

    max_feat = jnp.max(jnp.where(m > 0.0, tdl, -1e4), axis=1)

    concat = jnp.concatenate([cls_out, mean_feat, max_feat], axis=-1)
    fc_bn = (concat - params["fc_rmean"]) / jnp.sqrt(params["fc_rvar"] + BN_EPS)
    fc_bn = fc_bn * params["fc_gamma"] + params["fc_beta"]
    return fc_bn @ params["w_fc"]


def make_params(key, hidden_size, num_labels):
    H = hidden_size
    Dt = H - 1                 # TimeDistributed `layer` = Linear(H -> H-1) so fc in = 3H-2
    F = 3 * H - 2
    ks = jax.random.split(key, 8)
    return {
        "w_tdl": 0.1 * jax.random.normal(ks[0], (H, Dt), jnp.float32),
        "b_tdl": 0.1 * jax.random.normal(ks[1], (1, Dt), jnp.float32),
        "cls_gamma": 1.0 + 0.05 * jax.random.normal(ks[2], (1, H), jnp.float32),
        "cls_beta": 0.05 * jax.random.normal(ks[3], (1, H), jnp.float32),
        "cls_rmean": 0.05 * jax.random.normal(ks[4], (1, H), jnp.float32),
        "cls_rvar": jnp.ones((1, H), jnp.float32),
        "w_cls": 0.1 * jax.random.normal(ks[5], (H, H), jnp.float32),
        "fc_gamma": jnp.ones((1, F), jnp.float32),
        "fc_beta": jnp.zeros((1, F), jnp.float32),
        "fc_rmean": jnp.zeros((1, F), jnp.float32),
        "fc_rvar": jnp.ones((1, F), jnp.float32),
        "w_fc": 0.1 * jax.random.normal(ks[6], (F, num_labels), jnp.float32),
    }


if __name__ == "__main__":
    B, S, H, NUM_LABELS = 2, 8, 32, 4

    key = jax.random.PRNGKey(0)
    k_x, k_p = jax.random.split(key)

    last_hidden_state = jax.random.normal(k_x, (B, S, H), jnp.float32)
    # mask: first row fully valid, second row has padding at the tail
    attention_mask = jnp.stack([
        jnp.ones((S, 1), jnp.float32),
        jnp.concatenate([jnp.ones((5, 1), jnp.float32),
                         jnp.zeros((S - 5, 1), jnp.float32)], axis=0),
    ], axis=0)  # (B, S, 1)

    params = make_params(k_p, H, NUM_LABELS)

    out = meanmax_head(last_hidden_state, attention_mask, params)
    out = jax.block_until_ready(out)

    ref = reference_jax(last_hidden_state, attention_mask, params)
    assert out.shape == (B, NUM_LABELS)
    # bf16 MXU inputs (f32 accumulation) -> looser tolerance vs. the f32 reference
    assert jnp.allclose(out, ref, atol=5e-2, rtol=5e-2), (out, ref)

    print("KERNEL_OK")
</pallas_src>

<mosaic_0001>
module attributes {stable_mosaic.version = 11 : i64} {
  func.func @meanmax_head_kernel(%arg0: i32, %arg1: memref<2x16x32xbf16, #tpu.memory_space<vmem>>, %arg2: memref<2x16x1xf32, #tpu.memory_space<vmem>>, %arg3: memref<32x128xbf16, #tpu.memory_space<vmem>>, %arg4: memref<1x128xf32, #tpu.memory_space<vmem>>, %arg5: memref<32x128xbf16, #tpu.memory_space<vmem>>, %arg6: memref<128x128xbf16, #tpu.memory_space<vmem>>, %arg7: memref<128x128xbf16, #tpu.memory_space<vmem>>, %arg8: memref<1x128xf32, #tpu.memory_space<vmem>>, %arg9: memref<2x128xf32, #tpu.memory_space<vmem>>) attributes {dimension_semantics = [#tpu.dimension_semantics<parallel>], iteration_bounds = array<i64: 1>, scalar_prefetch = 0 : i64, scratch_operands = 0 : i64, tpu.core_type = #tpu.core_type<tc>, window_params = [{transform_indices = @transform_0, window_bounds = array<i64: 2, 16, 32>}, {transform_indices = @transform_1, window_bounds = array<i64: 2, 16, 1>}, {pipeline_mode = #tpu.pipeline_mode<synchronous>, transform_indices = @transform_2, window_bounds = array<i64: 32, 128>}, {pipeline_mode = #tpu.pipeline_mode<synchronous>, transform_indices = @transform_3, window_bounds = array<i64: 1, 128>}, {pipeline_mode = #tpu.pipeline_mode<synchronous>, transform_indices = @transform_4, window_bounds = array<i64: 32, 128>}, {pipeline_mode = #tpu.pipeline_mode<synchronous>, transform_indices = @transform_5, window_bounds = array<i64: 128, 128>}, {pipeline_mode = #tpu.pipeline_mode<synchronous>, transform_indices = @transform_6, window_bounds = array<i64: 128, 128>}, {pipeline_mode = #tpu.pipeline_mode<synchronous>, transform_indices = @transform_7, window_bounds = array<i64: 1, 128>}, {transform_indices = @transform_8, window_bounds = array<i64: 2, 128>}]} {
    %c0 = arith.constant 0 : index
    %c0_0 = arith.constant 0 : index
    %c0_1 = arith.constant 0 : index
    %0 = vector.load %arg1[%c0, %c0_0, %c0_1] : memref<2x16x32xbf16, #tpu.memory_space<vmem>>, vector<2x16x32xbf16>
    %1 = tpu.iota {dimensions = array<i32: 0>} : vector<16x1xi32>
    %c0_2 = arith.constant 0 : index
    %c0_3 = arith.constant 0 : index
    %c0_4 = arith.constant 0 : index
    %2 = vector.load %arg2[%c0_2, %c0_3, %c0_4] : memref<2x16x1xf32, #tpu.memory_space<vmem>>, vector<2x16x1xf32>
    %c0_i32 = arith.constant 0 : i32
    %3 = vector.broadcast %c0_i32 : i32 to vector<16x1xi32>
    %4 = arith.cmpi sgt, %1, %3 : vector<16x1xi32>
    %5 = arith.extui %4 : vector<16x1xi1> to vector<16x1xi32>
    %6 = arith.sitofp %5 : vector<16x1xi32> to vector<16x1xf32>
    %7 = vector.shape_cast %6 : vector<16x1xf32> to vector<1x16x1xf32>
    %8 = vector.broadcast %7 : vector<1x16x1xf32> to vector<2x16x1xf32>
    %9 = arith.mulf %2, %8 : vector<2x16x1xf32>
    %10 = vector.shape_cast %0 : vector<2x16x32xbf16> to vector<32x32xbf16>
    %c0_5 = arith.constant 0 : index
    %c0_6 = arith.constant 0 : index
    %11 = vector.load %arg3[%c0_5, %c0_6] : memref<32x128xbf16, #tpu.memory_space<vmem>>, vector<32x128xbf16>
    %cst = arith.constant dense<0.000000e+00> : vector<32x128xf32>
    %12 = tpu.matmul %10, %11, %cst {dimension_numbers = #tpu.dot_dimension_numbers<[1], [0], [0], [1], [0, 0, 1, 1], [], []>} : vector<32x32xbf16>, vector<32x128xbf16>, vector<32x128xf32> -> vector<32x128xf32>
    %c0_7 = arith.constant 0 : index
    %c0_8 = arith.constant 0 : index
    %13 = vector.load %arg4[%c0_7, %c0_8] : memref<1x128xf32, #tpu.memory_space<vmem>>, vector<1x128xf32>
    %14 = vector.broadcast %13 : vector<1x128xf32> to vector<32x128xf32>
    %15 = arith.addf %12, %14 : vector<32x128xf32>
    %16 = vector.shape_cast %15 : vector<32x128xf32> to vector<2x16x128xf32>
    %17 = vector.broadcast %9 : vector<2x16x1xf32> to vector<2x16x128xf32>
    %18 = arith.mulf %16, %17 : vector<2x16x128xf32>
    %cst_9 = arith.constant dense<0.000000e+00> : vector<2x128xf32>
    %19 = vector.multi_reduction <add>, %18, %cst_9 [1] : vector<2x16x128xf32> to vector<2x128xf32>
    %cst_10 = arith.constant dense<0.000000e+00> : vector<2x1xf32>
    %20 = vector.multi_reduction <add>, %9, %cst_10 [1] : vector<2x16x1xf32> to vector<2x1xf32>
    %cst_11 = arith.constant 9.99999971E-10 : f32
    %21 = vector.broadcast %cst_11 : f32 to vector<2x1xf32>
    %22 = arith.maximumf %20, %21 : vector<2x1xf32>
    %23 = vector.broadcast %22 : vector<2x1xf32> to vector<2x128xf32>
    %24 = arith.divf %19, %23 : vector<2x128xf32>
    %cst_12 = arith.constant 0.000000e+00 : f32
    %25 = vector.broadcast %cst_12 : f32 to vector<2x16x1xf32>
    %26 = arith.cmpf ogt, %9, %25 : vector<2x16x1xf32>
    %cst_13 = arith.constant -1.000000e+04 : f32
    %27 = vector.shape_cast %26 : vector<2x16x1xi1> to vector<2x16x1xi1>
    %28 = vector.broadcast %27 : vector<2x16x1xi1> to vector<2x16x128xi1>
    %29 = vector.broadcast %cst_13 : f32 to vector<2x16x128xf32>
    %30 = arith.select %28, %16, %29 : vector<2x16x128xi1>, vector<2x16x128xf32>
    %cst_14 = arith.constant dense<0xFF800000> : vector<2x128xf32>
    %31 = vector.multi_reduction <maximumf>, %30, %cst_14 [1] : vector<2x16x128xf32> to vector<2x128xf32>
    %32 = vector.extract_strided_slice %0 {offsets = [0, 0, 0], sizes = [2, 1, 32], strides = [1, 1, 1]} : vector<2x16x32xbf16> to vector<2x1x32xbf16>
    %33 = vector.shape_cast %32 : vector<2x1x32xbf16> to vector<2x32xbf16>
    %c0_15 = arith.constant 0 : index
    %c0_16 = arith.constant 0 : index
    %34 = vector.load %arg5[%c0_15, %c0_16] : memref<32x128xbf16, #tpu.memory_space<vmem>>, vector<32x128xbf16>
    %cst_17 = arith.constant dense<0.000000e+00> : vector<2x128xf32>
    %35 = tpu.matmul %33, %34, %cst_17 {dimension_numbers = #tpu.dot_dimension_numbers<[1], [0], [0], [1], [0, 0, 1, 1], [], []>} : vector<2x32xbf16>, vector<32x128xbf16>, vector<2x128xf32> -> vector<2x128xf32>
    %36 = arith.truncf %24 : vector<2x128xf32> to vector<2x128xbf16>
    %c0_18 = arith.constant 0 : index
    %c0_19 = arith.constant 0 : index
    %37 = vector.load %arg6[%c0_18, %c0_19] : memref<128x128xbf16, #tpu.memory_space<vmem>>, vector<128x128xbf16>
    %cst_20 = arith.constant dense<0.000000e+00> : vector<2x128xf32>
    %38 = tpu.matmul %36, %37, %cst_20 {dimension_numbers = #tpu.dot_dimension_numbers<[1], [0], [0], [1], [0, 0, 1, 1], [], []>} : vector<2x128xbf16>, vector<128x128xbf16>, vector<2x128xf32> -> vector<2x128xf32>
    %39 = arith.addf %35, %38 : vector<2x128xf32>
    %40 = arith.truncf %31 : vector<2x128xf32> to vector<2x128xbf16>
    %c0_21 = arith.constant 0 : index
    %c0_22 = arith.constant 0 : index
    %41 = vector.load %arg7[%c0_21, %c0_22] : memref<128x128xbf16, #tpu.memory_space<vmem>>, vector<128x128xbf16>
    %cst_23 = arith.constant dense<0.000000e+00> : vector<2x128xf32>
    %42 = tpu.matmul %40, %41, %cst_23 {dimension_numbers = #tpu.dot_dimension_numbers<[1], [0], [0], [1], [0, 0, 1, 1], [], []>} : vector<2x128xbf16>, vector<128x128xbf16>, vector<2x128xf32> -> vector<2x128xf32>
    %43 = arith.addf %39, %42 : vector<2x128xf32>
    %c0_24 = arith.constant 0 : index
    %c0_25 = arith.constant 0 : index
    %44 = vector.load %arg8[%c0_24, %c0_25] : memref<1x128xf32, #tpu.memory_space<vmem>>, vector<1x128xf32>
    %45 = vector.broadcast %44 : vector<1x128xf32> to vector<2x128xf32>
    %46 = arith.addf %43, %45 : vector<2x128xf32>
    %c0_26 = arith.constant 0 : index
    %c0_27 = arith.constant 0 : index
    %47 = vector.load %arg9[%c0_26, %c0_27] : memref<2x128xf32, #tpu.memory_space<vmem>>, vector<2x128xf32>
    tpu.vector_store %arg9[%c0_26, %c0_27], %46 {strides = array<i32>} : memref<2x128xf32, #tpu.memory_space<vmem>>, vector<2x128xf32>,
    return
  }
  func.func @transform_0(%arg0: i32) -> (i32, i32, i32) {
    %c0_i32 = arith.constant 0 : i32
    %c0_i32_0 = arith.constant 0 : i32
    %c0_i32_1 = arith.constant 0 : i32
    return %arg0, %c0_i32, %c0_i32_0 : i32, i32, i32
  }
  func.func @transform_1(%arg0: i32) -> (i32, i32, i32) {
    %c0_i32 = arith.constant 0 : i32
    %c0_i32_0 = arith.constant 0 : i32
    %c0_i32_1 = arith.constant 0 : i32
    return %arg0, %c0_i32, %c0_i32_0 : i32, i32, i32
  }
  func.func @transform_2(%arg0: i32) -> (i32, i32) {
    %c0_i32 = arith.constant 0 : i32
    %c0_i32_0 = arith.constant 0 : i32
    %c0_i32_1 = arith.constant 0 : i32
    return %c0_i32, %c0_i32_0 : i32, i32
  }
  func.func @transform_3(%arg0: i32) -> (i32, i32) {
    %c0_i32 = arith.constant 0 : i32
    %c0_i32_0 = arith.constant 0 : i32
    %c0_i32_1 = arith.constant 0 : i32
    return %c0_i32, %c0_i32_0 : i32, i32
  }
  func.func @transform_4(%arg0: i32) -> (i32, i32) {
    %c0_i32 = arith.constant 0 : i32
    %c0_i32_0 = arith.constant 0 : i32
    %c0_i32_1 = arith.constant 0 : i32
    return %c0_i32, %c0_i32_0 : i32, i32
  }
  func.func @transform_5(%arg0: i32) -> (i32, i32) {
    %c0_i32 = arith.constant 0 : i32
    %c0_i32_0 = arith.constant 0 : i32
    %c0_i32_1 = arith.constant 0 : i32
    return %c0_i32, %c0_i32_0 : i32, i32
  }
  func.func @transform_6(%arg0: i32) -> (i32, i32) {
    %c0_i32 = arith.constant 0 : i32
    %c0_i32_0 = arith.constant 0 : i32
    %c0_i32_1 = arith.constant 0 : i32
    return %c0_i32, %c0_i32_0 : i32, i32
  }
  func.func @transform_7(%arg0: i32) -> (i32, i32) {
    %c0_i32 = arith.constant 0 : i32
    %c0_i32_0 = arith.constant 0 : i32
    %c0_i32_1 = arith.constant 0 : i32
    return %c0_i32, %c0_i32_0 : i32, i32
  }
  func.func @transform_8(%arg0: i32) -> (i32, i32) {
    %c0_i32 = arith.constant 0 : i32
    %c0_i32_0 = arith.constant 0 : i32
    return %arg0, %c0_i32 : i32, i32
  }
}

module attributes {stable_mosaic.version = 11 : i64} {
  func.func @meanmax_head_kernel(%arg0: i32, %arg1: memref<2x16x32xbf16, #tpu.memory_space<vmem>>, %arg2: memref<2x16x1xf32, #tpu.memory_space<vmem>>, %arg3: memref<32x128xbf16, #tpu.memory_space<vmem>>, %arg4: memref<1x128xf32, #tpu.memory_space<vmem>>, %arg5: memref<32x128xbf16, #tpu.memory_space<vmem>>, %arg6: memref<128x128xbf16, #tpu.memory_space<vmem>>, %arg7: memref<128x128xbf16, #tpu.memory_space<vmem>>, %arg8: memref<1x128xf32, #tpu.memory_space<vmem>>, %arg9: memref<2x128xf32, #tpu.memory_space<vmem>>) attributes {dimension_semantics = [#tpu.dimension_semantics<parallel>], iteration_bounds = array<i64: 1>, scalar_prefetch = 0 : i64, scratch_operands = 0 : i64, tpu.core_type = #tpu.core_type<tc>, window_params = [{transform_indices = @transform_0, window_bounds = array<i64: 2, 16, 32>}, {transform_indices = @transform_1, window_bounds = array<i64: 2, 16, 1>}, {pipeline_mode = #tpu.pipeline_mode<synchronous>, transform_indices = @transform_2, window_bounds = array<i64: 32, 128>}, {pipeline_mode = #tpu.pipeline_mode<synchronous>, transform_indices = @transform_3, window_bounds = array<i64: 1, 128>}, {pipeline_mode = #tpu.pipeline_mode<synchronous>, transform_indices = @transform_4, window_bounds = array<i64: 32, 128>}, {pipeline_mode = #tpu.pipeline_mode<synchronous>, transform_indices = @transform_5, window_bounds = array<i64: 128, 128>}, {pipeline_mode = #tpu.pipeline_mode<synchronous>, transform_indices = @transform_6, window_bounds = array<i64: 128, 128>}, {pipeline_mode = #tpu.pipeline_mode<synchronous>, transform_indices = @transform_7, window_bounds = array<i64: 1, 128>}, {transform_indices = @transform_8, window_bounds = array<i64: 2, 128>}]} {
    %c0 = arith.constant 0 : index
    %c0_0 = arith.constant 0 : index
    %c0_1 = arith.constant 0 : index
    %0 = vector.load %arg1[%c0, %c0_0, %c0_1] : memref<2x16x32xbf16, #tpu.memory_space<vmem>>, vector<2x16x32xbf16>
    %1 = tpu.iota {dimensions = array<i32: 0>} : vector<16x1xi32>
    %c0_2 = arith.constant 0 : index
    %c0_3 = arith.constant 0 : index
    %c0_4 = arith.constant 0 : index
    %2 = vector.load %arg2[%c0_2, %c0_3, %c0_4] : memref<2x16x1xf32, #tpu.memory_space<vmem>>, vector<2x16x1xf32>
    %c0_i32 = arith.constant 0 : i32
    %3 = vector.broadcast %c0_i32 : i32 to vector<16x1xi32>
    %4 = arith.cmpi sgt, %1, %3 : vector<16x1xi32>
    %5 = arith.extui %4 : vector<16x1xi1> to vector<16x1xi32>
    %6 = arith.sitofp %5 : vector<16x1xi32> to vector<16x1xf32>
    %7 = vector.shape_cast %6 : vector<16x1xf32> to vector<1x16x1xf32>
    %8 = vector.broadcast %7 : vector<1x16x1xf32> to vector<2x16x1xf32>
    %9 = arith.mulf %2, %8 : vector<2x16x1xf32>
    %10 = vector.shape_cast %0 : vector<2x16x32xbf16> to vector<32x32xbf16>
    %c0_5 = arith.constant 0 : index
    %c0_6 = arith.constant 0 : index
    %11 = vector.load %arg3[%c0_5, %c0_6] : memref<32x128xbf16, #tpu.memory_space<vmem>>, vector<32x128xbf16>
    %cst = arith.constant dense<0.000000e+00> : vector<32x128xf32>
    %12 = tpu.matmul %10, %11, %cst {dimension_numbers = #tpu.dot_dimension_numbers<[1], [0], [0], [1], [0, 0, 1, 1], [], []>} : vector<32x32xbf16>, vector<32x128xbf16>, vector<32x128xf32> -> vector<32x128xf32>
    %c0_7 = arith.constant 0 : index
    %c0_8 = arith.constant 0 : index
    %13 = vector.load %arg4[%c0_7, %c0_8] : memref<1x128xf32, #tpu.memory_space<vmem>>, vector<1x128xf32>
    %14 = vector.broadcast %13 : vector<1x128xf32> to vector<32x128xf32>
    %15 = arith.addf %12, %14 : vector<32x128xf32>
    %16 = vector.shape_cast %15 : vector<32x128xf32> to vector<2x16x128xf32>
    %17 = vector.broadcast %9 : vector<2x16x1xf32> to vector<2x16x128xf32>
    %18 = arith.mulf %16, %17 : vector<2x16x128xf32>
    %cst_9 = arith.constant dense<0.000000e+00> : vector<2x128xf32>
    %19 = vector.multi_reduction <add>, %18, %cst_9 [1] : vector<2x16x128xf32> to vector<2x128xf32>
    %cst_10 = arith.constant dense<0.000000e+00> : vector<2x1xf32>
    %20 = vector.multi_reduction <add>, %9, %cst_10 [1] : vector<2x16x1xf32> to vector<2x1xf32>
    %cst_11 = arith.constant 9.99999971E-10 : f32
    %21 = vector.broadcast %cst_11 : f32 to vector<2x1xf32>
    %22 = arith.maximumf %20, %21 : vector<2x1xf32>
    %23 = vector.broadcast %22 : vector<2x1xf32> to vector<2x128xf32>
    %24 = arith.divf %19, %23 : vector<2x128xf32>
    %cst_12 = arith.constant 0.000000e+00 : f32
    %25 = vector.broadcast %cst_12 : f32 to vector<2x16x1xf32>
    %26 = arith.cmpf ogt, %9, %25 : vector<2x16x1xf32>
    %cst_13 = arith.constant -1.000000e+04 : f32
    %27 = vector.shape_cast %26 : vector<2x16x1xi1> to vector<2x16x1xi1>
    %28 = vector.broadcast %27 : vector<2x16x1xi1> to vector<2x16x128xi1>
    %29 = vector.broadcast %cst_13 : f32 to vector<2x16x128xf32>
    %30 = arith.select %28, %16, %29 : vector<2x16x128xi1>, vector<2x16x128xf32>
    %cst_14 = arith.constant dense<0xFF800000> : vector<2x128xf32>
    %31 = vector.multi_reduction <maximumf>, %30, %cst_14 [1] : vector<2x16x128xf32> to vector<2x128xf32>
    %32 = vector.extract_strided_slice %0 {offsets = [0, 0, 0], sizes = [2, 1, 32], strides = [1, 1, 1]} : vector<2x16x32xbf16> to vector<2x1x32xbf16>
    %33 = vector.shape_cast %32 : vector<2x1x32xbf16> to vector<2x32xbf16>
    %c0_15 = arith.constant 0 : index
    %c0_16 = arith.constant 0 : index
    %34 = vector.load %arg5[%c0_15, %c0_16] : memref<32x128xbf16, #tpu.memory_space<vmem>>, vector<32x128xbf16>
    %cst_17 = arith.constant dense<0.000000e+00> : vector<2x128xf32>
    %35 = tpu.matmul %33, %34, %cst_17 {dimension_numbers = #tpu.dot_dimension_numbers<[1], [0], [0], [1], [0, 0, 1, 1], [], []>} : vector<2x32xbf16>, vector<32x128xbf16>, vector<2x128xf32> -> vector<2x128xf32>
    %36 = arith.truncf %24 : vector<2x128xf32> to vector<2x128xbf16>
    %c0_18 = arith.constant 0 : index
    %c0_19 = arith.constant 0 : index
    %37 = vector.load %arg6[%c0_18, %c0_19] : memref<128x128xbf16, #tpu.memory_space<vmem>>, vector<128x128xbf16>
    %cst_20 = arith.constant dense<0.000000e+00> : vector<2x128xf32>
    %38 = tpu.matmul %36, %37, %cst_20 {dimension_numbers = #tpu.dot_dimension_numbers<[1], [0], [0], [1], [0, 0, 1, 1], [], []>} : vector<2x128xbf16>, vector<128x128xbf16>, vector<2x128xf32> -> vector<2x128xf32>
    %39 = arith.addf %35, %38 : vector<2x128xf32>
    %40 = arith.truncf %31 : vector<2x128xf32> to vector<2x128xbf16>
    %c0_21 = arith.constant 0 : index
    %c0_22 = arith.constant 0 : index
    %41 = vector.load %arg7[%c0_21, %c0_22] : memref<128x128xbf16, #tpu.memory_space<vmem>>, vector<128x128xbf16>
    %cst_23 = arith.constant dense<0.000000e+00> : vector<2x128xf32>
    %42 = tpu.matmul %40, %41, %cst_23 {dimension_numbers = #tpu.dot_dimension_numbers<[1], [0], [0], [1], [0, 0, 1, 1], [], []>} : vector<2x128xbf16>, vector<128x128xbf16>, vector<2x128xf32> -> vector<2x128xf32>
    %43 = arith.addf %39, %42 : vector<2x128xf32>
    %c0_24 = arith.constant 0 : index
    %c0_25 = arith.constant 0 : index
    %44 = vector.load %arg8[%c0_24, %c0_25] : memref<1x128xf32, #tpu.memory_space<vmem>>, vector<1x128xf32>
    %45 = vector.broadcast %44 : vector<1x128xf32> to vector<2x128xf32>
    %46 = arith.addf %43, %45 : vector<2x128xf32>
    %c0_26 = arith.constant 0 : index
    %c0_27 = arith.constant 0 : index
    %47 = vector.load %arg9[%c0_26, %c0_27] : memref<2x128xf32, #tpu.memory_space<vmem>>, vector<2x128xf32>
    tpu.vector_store %arg9[%c0_26, %c0_27], %46 {strides = array<i32>} : memref<2x128xf32, #tpu.memory_space<vmem>>, vector<2x128xf32>,
    return
  }
  func.func @transform_0(%arg0: i32) -> (i32, i32, i32) {
    %c0_i32 = arith.constant 0 : i32
    %c0_i32_0 = arith.constant 0 : i32
    %c0_i32_1 = arith.constant 0 : i32
    return %arg0, %c0_i32, %c0_i32_0 : i32, i32, i32
  }
  func.func @transform_1(%arg0: i32) -> (i32, i32, i32) {
    %c0_i32 = arith.constant 0 : i32
    %c0_i32_0 = arith.constant 0 : i32
    %c0_i32_1 = arith.constant 0 : i32
    return %arg0, %c0_i32, %c0_i32_0 : i32, i32, i32
  }
  func.func @transform_2(%arg0: i32) -> (i32, i32) {
    %c0_i32 = arith.constant 0 : i32
    %c0_i32_0 = arith.constant 0 : i32
    %c0_i32_1 = arith.constant 0 : i32
    return %c0_i32, %c0_i32_0 : i32, i32
  }
  func.func @transform_3(%arg0: i32) -> (i32, i32) {
    %c0_i32 = arith.constant 0 : i32
    %c0_i32_0 = arith.constant 0 : i32
    %c0_i32_1 = arith.constant 0 : i32
    return %c0_i32, %c0_i32_0 : i32, i32
  }
  func.func @transform_4(%arg0: i32) -> (i32, i32) {
    %c0_i32 = arith.constant 0 : i32
    %c0_i32_0 = arith.constant 0 : i32
    %c0_i32_1 = arith.constant 0 : i32
    return %c0_i32, %c0_i32_0 : i32, i32
  }
  func.func @transform_5(%arg0: i32) -> (i32, i32) {
    %c0_i32 = arith.constant 0 : i32
    %c0_i32_0 = arith.constant 0 : i32
    %c0_i32_1 = arith.constant 0 : i32
    return %c0_i32, %c0_i32_0 : i32, i32
  }
  func.func @transform_6(%arg0: i32) -> (i32, i32) {
    %c0_i32 = arith.constant 0 : i32
    %c0_i32_0 = arith.constant 0 : i32
    %c0_i32_1 = arith.constant 0 : i32
    return %c0_i32, %c0_i32_0 : i32, i32
  }
  func.func @transform_7(%arg0: i32) -> (i32, i32) {
    %c0_i32 = arith.constant 0 : i32
    %c0_i32_0 = arith.constant 0 : i32
    %c0_i32_1 = arith.constant 0 : i32
    return %c0_i32, %c0_i32_0 : i32, i32
  }
  func.func @transform_8(%arg0: i32) -> (i32, i32) {
    %c0_i32 = arith.constant 0 : i32
    %c0_i32_0 = arith.constant 0 : i32
    return %arg0, %c0_i32 : i32, i32
  }
}

</mosaic_0001>

<llo_original>
// kernel: _meanmax_head_impl.1
$region0: #{_meanmax_head_impl.1}
  #allocation0 [shape = 'u32[]', space=smem, size = 0x4, offset = 0x4, fixed_abs, tag = 'smem constant byte address 0x4 - core index']
  #allocation1 [shape = 'u32[144,128]{1,0:T(1,128)}', space=vmem, size = 0x12000, scoped, tag = 'internal scratch']
  %s0 = inlined_call_operand.vmem [shape: bf16[2,16,32], index: 0, kind: input, shape index: {}]
  %s1 = inlined_call_operand.vmem [shape: f32[2,16,1], index: 1, kind: input, shape index: {}]
  %s2 = inlined_call_operand.vmem [shape: bf16[32,128], index: 2, kind: input, shape index: {}]
  %s3 = inlined_call_operand.vmem [shape: f32[1,128], index: 3, kind: input, shape index: {}]
  %s4 = inlined_call_operand.vmem [shape: bf16[32,128], index: 4, kind: input, shape index: {}]
  %s5 = inlined_call_operand.vmem [shape: bf16[128,128], index: 5, kind: input, shape index: {}]
  %s6 = inlined_call_operand.vmem [shape: bf16[128,128], index: 6, kind: input, shape index: {}]
  %s7 = inlined_call_operand.vmem [shape: f32[1,128], index: 7, kind: input, shape index: {}]
  %s8 = inlined_call_operand.hbm [shape: f32[2,128], index: 8, kind: output, shape index: {}]
  %s9 = sld [smem:[#allocation0]]
  $region42: #{_meanmax_head_impl.1} parent=0
    _
  %s11 = ssub.s32 1, %s9
  %s12 = scalar_select 0, %s11, %s9
  $region1: #{_meanmax_head_impl.1} parent=0
    #allocation2 [shape = 'u8[1024]{0}', space=vmem, size = 0x400, scoped, tag = 'output window, operand 0, single buffered']
    #allocation3 [shape = 's32[1]{0}', space=sflag, size = 0x4, scoped, tag = 'scoped memory for _meanmax_head_impl.1']
    %13 = vsyncpa [#allocation3], 0
    // Predicated region
    $region2: #{_meanmax_head_impl.1} parent=1 // pred_check
      _
    $region3: #{_meanmax_head_impl.1} parent=1 // pred_check_branch
      %15 = sbr.rel (0) target = $region5
    $region4: #{_meanmax_head_impl.1} parent=1 // pred_region
      _
    $region5: #{_meanmax_head_impl.1} parent=1 // pred_fallthru
      _
    // Predicated region
    $region6: #{_meanmax_head_impl.1} parent=1 // pred_check
      _
    $region7: #{_meanmax_head_impl.1} parent=1 // pred_check_branch
      %17 = sbr.rel (0) target = $region9
    $region8: #{_meanmax_head_impl.1} parent=1 // pred_region
      _
    $region9: #{_meanmax_head_impl.1} parent=1 // pred_fallthru
      _
    // Predicated region
    $region10: #{_meanmax_head_impl.1} parent=1 // pred_check
      _
    $region11: #{_meanmax_head_impl.1} parent=1 // pred_check_branch
      %19 = sbr.rel (0) target = $region13
    $region12: #{_meanmax_head_impl.1} parent=1 // pred_region
      _
    $region13: #{_meanmax_head_impl.1} parent=1 // pred_fallthru
      _
    // Predicated region
    $region14: #{_meanmax_head_impl.1} parent=1 // pred_check
      _
    $region15: #{_meanmax_head_impl.1} parent=1 // pred_check_branch
      %21 = sbr.rel (0) target = $region17
    $region16: #{_meanmax_head_impl.1} parent=1 // pred_region
      _
    $region17: #{_meanmax_head_impl.1} parent=1 // pred_fallthru
      _
    // Predicated region
    $region18: #{_meanmax_head_impl.1} parent=1 // pred_check
      _
    $region19: #{_meanmax_head_impl.1} parent=1 // pred_check_branch
      %23 = sbr.rel (0) target = $region21
    $region20: #{_meanmax_head_impl.1} parent=1 // pred_region
      _
    $region21: #{_meanmax_head_impl.1} parent=1 // pred_fallthru
      _
    // Predicated region
    $region22: #{_meanmax_head_impl.1} parent=1 // pred_check
      _
    $region23: #{_meanmax_head_impl.1} parent=1 // pred_check_branch
      %25 = sbr.rel (0) target = $region25
    $region24: #{_meanmax_head_impl.1} parent=1 // pred_region
      _
    $region25: #{_meanmax_head_impl.1} parent=1 // pred_fallthru
      _
    // Predicated region
    $region26: #{_meanmax_head_impl.1} parent=1 // pred_check
      _
    $region27: #{_meanmax_head_impl.1} parent=1 // pred_check_branch
      %27 = sbr.rel (0) target = $region29
    $region28: #{_meanmax_head_impl.1} parent=1 // pred_region
      _
    $region29: #{_meanmax_head_impl.1} parent=1 // pred_fallthru
      _
    // Predicated region
    $region30: #{_meanmax_head_impl.1} parent=1 // pred_check
      _
    $region31: #{_meanmax_head_impl.1} parent=1 // pred_check_branch
      %29 = sbr.rel (0) target = $region33
    $region32: #{_meanmax_head_impl.1} parent=1 // pred_region
      _
    $region33: #{_meanmax_head_impl.1} parent=1 // pred_fallthru
      _
    %v31 = vld [vmem:[%s0] sm:$0xf]
    %v32 = vld [vmem:[%s0 + $0x4] sm:$0xf]
    %v33 = vld [vmem:[%s0 + $0x8] sm:$0xf]
    %v34 = vld [vmem:[%s0 + $0xc] sm:$0xf]
    %v35 = vlaneseq
    %v36 = vshrl.u32 %v35, 7
    %v37 = vadd.s32 %v36, 8
    %v38 = vld [vmem:[%s1] sm:$0xff]
    %v39 = vld [vmem:[%s1 + $0x8] sm:$0xff]
    %v40 = vld [vmem:[%s1 + $0x10] sm:$0xff]
    %v41 = vld [vmem:[%s1 + $0x18] sm:$0xff]
    %vm42 = vcmp.gt.s32.totalorder %v36, 0
    %vm43 = vcmp.gt.s32.totalorder %v37, 0
    %v44 = vsel %vm42, 1, 0
    %v45 = vsel %vm43, 1, 0
    %v46 = vcvt.s32.f32 %v44
    %v47 = vcvt.s32.f32 %v45
    %v48 = vmul.f32 %v38, %v46
    %v49 = vmul.f32 %v39, %v47
    %v50 = vmul.f32 %v40, %v46
    %v51 = vmul.f32 %v41, %v47
    %v52 = vld [vmem:[%s2] sm:$0xf]
    %v53 = vld [vmem:[%s2 + $0x4] sm:$0xf]
    %v54 = vld [vmem:[%s2 + $0x8] sm:$0xf]
    %v55 = vld [vmem:[%s2 + $0xc] sm:$0xf]
    %v56 = vld [vmem:[%s3] sm:$0x1]
    %v58 = vlaneseq
    %v59 = vshrl.u32 %v58, 7
    %v60 = vsub.s32 0, %v59
    %v61 = vrot.slane %v56, %v60
    %v67 = vunpack.c.l.b16 %v31
    %v68 = vunpack.c.l.b16 %v32
    %v69 = vunpack.c.l.b16 %v33
    %v70 = vunpack.c.l.b16 %v34
    %v71 = vpack.c.b16 %v68, %v67
    %v72 = vpack.c.b16 %v70, %v69
    %v77 = vunpack.c.l.b16 %v52
    %v78 = vunpack.c.l.b16 %v53
    %v79 = vunpack.c.l.b16 %v54
    %v80 = vunpack.c.l.b16 %v55
    %v81 = vpack.c.b16 %v78, %v77
    %v82 = vpack.c.b16 %v80, %v79
    %vm85 = vcmask 261120
    %v87 = vsel %vm85, %v71, 0
    %v90 = vsel %vm85, %v72, 0
    %92 = vmatprep.subr.bf16.mxu0 0
    %93 = vmatpush1.bf16.msra.mxu0 %v81
    %94 = vmatprep.subr.bf16.mxu0 0
    %95 = vmatpush1.bf16.msra.mxu0 %v82
    %96 = vmatprep.subr.bf16.mxu0 0
    %97 = vmatpush1.bf16.msra.mxu0 0
    %98 = vmatprep.subr.bf16.mxu0 0
    %99 = vmatpush1.bf16.msra.mxu0 0
    %100 = vmatprep.subr.bf16.mxu0 0
    %101 = vmatpush1.bf16.msra.mxu0 0
    %102 = vmatprep.subr.bf16.mxu0 0
    %103 = vmatpush1.bf16.msra.mxu0 0
    %104 = vmatprep.subr.bf16.mxu0 0
    %105 = vmatpush1.bf16.msra.mxu0 0
    %106 = vmatprep.subr.bf16.mxu0 0
    %107 = vmatpush1.bf16.msra.mxu0 0
    %108 = vmatprep.subr.bf16.mxu0 0
    %109 = vmatpush1.bf16.msra.mxu0 0
    %110 = vmatprep.subr.bf16.mxu0 0
    %111 = vmatpush1.bf16.msra.mxu0 0
    %112 = vmatprep.subr.bf16.mxu0 0
    %113 = vmatpush1.bf16.msra.mxu0 0
    %114 = vmatprep.subr.bf16.mxu0 0
    %115 = vmatpush1.bf16.msra.mxu0 0
    %116 = vmatprep.subr.bf16.mxu0 0
    %117 = vmatpush1.bf16.msra.mxu0 0
    %118 = vmatprep.subr.bf16.mxu0 0
    %119 = vmatpush1.bf16.msra.mxu0 0
    %120 = vmatprep.subr.bf16.mxu0 0
    %121 = vmatpush1.bf16.msra.mxu0 0
    %122 = vmatprep.subr.bf16.mxu0 0
    %123 = vmatpush1.bf16.msra.mxu0 0
    %124 = vmatprep.mubr.bf16.mxu0 0
    %125 = vmatmul.mubr.bf16.gmra.mrb[0].mxu0 %v87
    %v126 = vpop.f32.mrb[0].mxu0
    %v127 = vadd.f32 %v61, %v126
    %v128 = vpop.f32.mrb[0].mxu0
    %v129 = vpop.f32.mrb[0].mxu0
    %v130 = vadd.f32 %v61, %v129
    %v131 = vpop.f32.mrb[0].mxu0
    %132 = vmatprep.mubr.bf16.mxu0 0
    %133 = vmatmul.mubr.bf16.gmra.mrb[0].mxu0 %v90
    %v134 = vpop.f32.mrb[0].mxu0
    %v135 = vadd.f32 %v61, %v134
    %v136 = vpop.f32.mrb[0].mxu0
    %v137 = vpop.f32.mrb[0].mxu0
    %v138 = vadd.f32 %v61, %v137
    %v139 = vpop.f32.mrb[0].mxu0
    %140 = vdwg.mxu0
    %142 = vset.pattern.permute.xlu0 0
    %143 = vperm.xlu0 %142, %v48
    %v144 = vpop.permute.xlu0 %143
    %147 = vset.pattern.permute.xlu0 0
    %148 = vperm.xlu0 %147, %v49
    %v149 = vpop.permute.xlu0 %148
    %152 = vset.pattern.permute.xlu0 0
    %153 = vperm.xlu0 %152, %v50
    %v154 = vpop.permute.xlu0 %153
    %157 = vset.pattern.permute.xlu0 0
    %158 = vperm.xlu0 %157, %v51
    %v159 = vpop.permute.xlu0 %158
    %v161 = vmul.f32 %v127, %v144
    %v162 = vmul.f32 %v130, %v149
    %v163 = vmul.f32 %v135, %v154
    %v164 = vmul.f32 %v138, %v159
    %v165 = vadd.f32 %v161, %v162
    %v166 = vrot.slane %v165, 4
    %v167 = vadd.f32 %v165, %v166
    %v168 = vrot.slane %v167, 2
    %v169 = vadd.f32 %v167, %v168
    %v170 = vrot.slane %v169, 1
    %v171 = vadd.f32 %v169, %v170
    %v172 = vadd.f32 %v163, %v164
    %v173 = vrot.slane %v172, 4
    %v174 = vadd.f32 %v172, %v173
    %v175 = vrot.slane %v174, 2
    %v176 = vadd.f32 %v174, %v175
    %v177 = vrot.slane %v176, 1
    %v178 = vadd.f32 %v176, %v177
    %vm179 = vcmask 7168
    %v180 = vsel %vm179, %v48, 0.0
    %v181 = vsel %vm179, %v49, 0.0
    %v182 = vadd.f32 %v180, %v181
    %v183 = vrot.slane %v182, 4
    %v184 = vadd.f32 %v182, %v183
    %v185 = vrot.slane %v184, 2
    %v186 = vadd.f32 %v184, %v185
    %v187 = vrot.slane %v186, 1
    %v188 = vadd.f32 %v186, %v187
    %v189 = vsel %vm179, %v50, 0.0
    %v190 = vsel %vm179, %v51, 0.0
    %v191 = vadd.f32 %v189, %v190
    %v192 = vrot.slane %v191, 4
    %v193 = vadd.f32 %v191, %v192
    %v194 = vrot.slane %v193, 2
    %v195 = vadd.f32 %v193, %v194
    %v196 = vrot.slane %v195, 1
    %v197 = vadd.f32 %v195, %v196
    %v198 = vmax.f32 %v188, 1e-09
    %v199 = vmax.f32 %v197, 1e-09
    %201 = vset.pattern.permute.xlu0 0
    %202 = vperm.xlu0 %201, %v198
    %v203 = vpop.permute.xlu0 %202
    %206 = vset.pattern.permute.xlu0 0
    %207 = vperm.xlu0 %206, %v199
    %v208 = vpop.permute.xlu0 %207
    %v210 = vrcp.pop %v203
    %v211 = vmul.f32 %v171, %v210
    %v212 = vrcp.pop %v208
    %v213 = vmul.f32 %v178, %v212
    %vm214 = vcmp.gt.f32.partialorder %v48, 0.0
    %vm215 = vcmp.gt.f32.partialorder %v49, 0.0
    %vm216 = vcmp.gt.f32.partialorder %v50, 0.0
    %vm217 = vcmp.gt.f32.partialorder %v51, 0.0
    %v218 = vsel %vm214, 1, 0
    %v219 = vsel %vm215, 1, 0
    %v220 = vsel %vm216, 1, 0
    %v221 = vsel %vm217, 1, 0
    %222 = vset.pattern.permute.xlu0 0
    %223 = vperm.xlu0 %222, %v218
    %v224 = vpop.permute.xlu0 %223
    %225 = vset.pattern.permute.xlu0 0
    %226 = vperm.xlu0 %225, %v219
    %v227 = vpop.permute.xlu0 %226
    %228 = vset.pattern.permute.xlu0 0
    %229 = vperm.xlu0 %228, %v220
    %v230 = vpop.permute.xlu0 %229
    %231 = vset.pattern.permute.xlu0 0
    %232 = vperm.xlu0 %231, %v221
    %v233 = vpop.permute.xlu0 %232
    %vm234 = vcmp.eq.s32.totalorder %v224, 1
    %vm235 = vcmp.eq.s32.totalorder %v227, 1
    %vm236 = vcmp.eq.s32.totalorder %v230, 1
    %vm237 = vcmp.eq.s32.totalorder %v233, 1
    %v238 = vsel %vm234, %v127, -10000.0
    %v239 = vsel %vm235, %v130, -10000.0
    %v240 = vsel %vm236, %v135, -10000.0
    %v241 = vsel %vm237, %v138, -10000.0
    %v242 = vmax.f32 %v238, %v239
    %v243 = vrot.slane %v242, 4
    %v244 = vmax.f32 %v242, %v243
    %v245 = vrot.slane %v244, 2
    %v246 = vmax.f32 %v244, %v245
    %v247 = vrot.slane %v246, 1
    %v248 = vmax.f32 %v246, %v247
    %v249 = vmax.f32 %v240, %v241
    %v250 = vrot.slane %v249, 4
    %v251 = vmax.f32 %v249, %v250
    %v252 = vrot.slane %v251, 2
    %v253 = vmax.f32 %v251, %v252
    %v254 = vrot.slane %v253, 1
    %v255 = vmax.f32 %v253, %v254
    %v256 = vld [vmem:[%s4] sm:$0xf]
    %v257 = vld [vmem:[%s4 + $0x4] sm:$0xf]
    %v258 = vld [vmem:[%s4 + $0x8] sm:$0xf]
    %v259 = vld [vmem:[%s4 + $0xc] sm:$0xf]
    %v260 = vpack.c.bf16 %v211, %v211
    %v261 = vpack.c.bf16 %v213, %v213
    %v262 = vld [vmem:[%s5] sm:$0xf]
    %v263 = vld [vmem:[%s5 + $0x4] sm:$0xf]
    %v264 = vld [vmem:[%s5 + $0x8] sm:$0xf]
    %v265 = vld [vmem:[%s5 + $0xc] sm:$0xf]
    %v266 = vld [vmem:[%s5 + $0x10] sm:$0xf]
    %v267 = vld [vmem:[%s5 + $0x14] sm:$0xf]
    %v268 = vld [vmem:[%s5 + $0x18] sm:$0xf]
    %v269 = vld [vmem:[%s5 + $0x1c] sm:$0xf]
    %v270 = vld [vmem:[%s5 + $0x20] sm:$0xf]
    %v271 = vld [vmem:[%s5 + $0x24] sm:$0xf]
    %v272 = vld [vmem:[%s5 + $0x28] sm:$0xf]
    %v273 = vld [vmem:[%s5 + $0x2c] sm:$0xf]
    %v274 = vld [vmem:[%s5 + $0x30] sm:$0xf]
    %v275 = vld [vmem:[%s5 + $0x34] sm:$0xf]
    %v276 = vld [vmem:[%s5 + $0x38] sm:$0xf]
    %v277 = vld [vmem:[%s5 + $0x3c] sm:$0xf]
    %v280 = vunpack.c.l.b16 %v260
    %v281 = vunpack.c.l.b16 %v261
    %vm282 = vcmask 1041409
    %v283 = vsel %vm282, %v281, %v280
    %v284 = vpack.c.b16 %v283, %v283
    %v302 = vunpack.c.l.b16 %v262
    %v303 = vunpack.c.l.b16 %v263
    %v304 = vunpack.c.l.b16 %v264
    %v305 = vunpack.c.l.b16 %v265
    %v306 = vunpack.c.l.b16 %v266
    %v307 = vunpack.c.l.b16 %v267
    %v308 = vunpack.c.l.b16 %v268
    %v309 = vunpack.c.l.b16 %v269
    %v310 = vunpack.c.l.b16 %v270
    %v311 = vunpack.c.l.b16 %v271
    %v312 = vunpack.c.l.b16 %v272
    %v313 = vunpack.c.l.b16 %v273
    %v314 = vunpack.c.l.b16 %v274
    %v315 = vunpack.c.l.b16 %v275
    %v316 = vunpack.c.l.b16 %v276
    %v317 = vunpack.c.l.b16 %v277
    %v318 = vpack.c.b16 %v303, %v302
    %v319 = vpack.c.b16 %v305, %v304
    %v320 = vpack.c.b16 %v307, %v306
    %v321 = vpack.c.b16 %v309, %v308
    %v322 = vpack.c.b16 %v311, %v310
    %v323 = vpack.c.b16 %v313, %v312
    %v324 = vpack.c.b16 %v315, %v314
    %v325 = vpack.c.b16 %v317, %v316
    %334 = vmatprep.subr.bf16.mxu0 0
    %335 = vmatpush1.bf16.msra.mxu0 %v318
    %336 = vmatprep.subr.bf16.mxu0 0
    %337 = vmatpush1.bf16.msra.mxu0 %v319
    %338 = vmatprep.subr.bf16.mxu0 0
    %339 = vmatpush1.bf16.msra.mxu0 %v320
    %340 = vmatprep.subr.bf16.mxu0 0
    %341 = vmatpush1.bf16.msra.mxu0 %v321
    %342 = vmatprep.subr.bf16.mxu0 0
    %343 = vmatpush1.bf16.msra.mxu0 %v322
    %344 = vmatprep.subr.bf16.mxu0 0
    %345 = vmatpush1.bf16.msra.mxu0 %v323
    %346 = vmatprep.subr.bf16.mxu0 0
    %347 = vmatpush1.bf16.msra.mxu0 %v324
    %348 = vmatprep.subr.bf16.mxu0 0
    %349 = vmatpush1.bf16.msra.mxu0 %v325
    %350 = vmatprep.subr.bf16.mxu0 0
    %351 = vmatpush1.bf16.msra.mxu0 0
    %352 = vmatprep.subr.bf16.mxu0 0
    %353 = vmatpush1.bf16.msra.mxu0 0
    %354 = vmatprep.subr.bf16.mxu0 0
    %355 = vmatpush1.bf16.msra.mxu0 0
    %356 = vmatprep.subr.bf16.mxu0 0
    %357 = vmatpush1.bf16.msra.mxu0 0
    %358 = vmatprep.subr.bf16.mxu0 0
    %359 = vmatpush1.bf16.msra.mxu0 0
    %360 = vmatprep.subr.bf16.mxu0 0
    %361 = vmatpush1.bf16.msra.mxu0 0
    %362 = vmatprep.subr.bf16.mxu0 0
    %363 = vmatpush1.bf16.msra.mxu0 0
    %364 = vmatprep.subr.bf16.mxu0 0
    %365 = vmatpush1.bf16.msra.mxu0 0
    %366 = vmatprep.mubr.bf16.mxu0 0
    %367 = vmatmul.mubr.bf16.gmra.mrb[0].mxu0 %v284
    %v368 = vpop.f32.mrb[0].mxu0
    %v369 = vadd.f32 0.0, %v368
    %v370 = vpop.f32.mrb[0].mxu0
    %v371 = vpop.f32.mrb[0].mxu0
    %v372 = vpop.f32.mrb[0].mxu0
    %373 = vdwg.mxu0
    %v374 = vpack.c.b16 %v67, %v67
    %v375 = vpack.c.b16 %v69, %v69
    %v376 = vunpack.c.l.b16 %v374
    %v377 = vunpack.c.l.b16 %v375
    %v378 = vrot.slane %v377, 7
    %v379 = vsel %vm282, %v378, %v376
    %v380 = vpack.c.b16 %v379, %v379
    %v385 = vunpack.c.l.b16 %v256
    %v386 = vunpack.c.l.b16 %v257
    %v387 = vunpack.c.l.b16 %v258
    %v388 = vunpack.c.l.b16 %v259
    %v389 = vpack.c.b16 %v386, %v385
    %v390 = vpack.c.b16 %v388, %v387
    %v394 = vsel %vm85, %v380, 0
    %396 = vmatprep.subr.bf16.mxu0 0
    %397 = vmatpush1.bf16.msra.mxu0 %v389
    %398 = vmatprep.subr.bf16.mxu0 0
    %399 = vmatpush1.bf16.msra.mxu0 %v390
    %400 = vmatprep.subr.bf16.mxu0 0
    %401 = vmatpush1.bf16.msra.mxu0 0
    %402 = vmatprep.subr.bf16.mxu0 0
    %403 = vmatpush1.bf16.msra.mxu0 0
    %404 = vmatprep.subr.bf16.mxu0 0
    %405 = vmatpush1.bf16.msra.mxu0 0
    %406 = vmatprep.subr.bf16.mxu0 0
    %407 = vmatpush1.bf16.msra.mxu0 0
    %408 = vmatprep.subr.bf16.mxu0 0
    %409 = vmatpush1.bf16.msra.mxu0 0
    %410 = vmatprep.subr.bf16.mxu0 0
    %411 = vmatpush1.bf16.msra.mxu0 0
    %412 = vmatprep.subr.bf16.mxu0 0
    %413 = vmatpush1.bf16.msra.mxu0 0
    %414 = vmatprep.subr.bf16.mxu0 0
    %415 = vmatpush1.bf16.msra.mxu0 0
    %416 = vmatprep.subr.bf16.mxu0 0
    %417 = vmatpush1.bf16.msra.mxu0 0
    %418 = vmatprep.subr.bf16.mxu0 0
    %419 = vmatpush1.bf16.msra.mxu0 0
    %420 = vmatprep.subr.bf16.mxu0 0
    %421 = vmatpush1.bf16.msra.mxu0 0
    %422 = vmatprep.subr.bf16.mxu0 0
    %423 = vmatpush1.bf16.msra.mxu0 0
    %424 = vmatprep.subr.bf16.mxu0 0
    %425 = vmatpush1.bf16.msra.mxu0 0
    %426 = vmatprep.subr.bf16.mxu0 0
    %427 = vmatpush1.bf16.msra.mxu0 0
    %428 = vmatprep.mubr.bf16.mxu0 0
    %429 = vmatmul.mubr.bf16.gmra.mrb[0].mxu0 %v394
    %v430 = vpop.f32.mrb[0].mxu0
    %v431 = vadd.f32 %v369, %v430
    %v432 = vpop.f32.mrb[0].mxu0
    %v433 = vpop.f32.mrb[0].mxu0
    %v434 = vpop.f32.mrb[0].mxu0
    %435 = vdwg.mxu0
    %v436 = vpack.c.bf16 %v248, %v248
    %v437 = vpack.c.bf16 %v255, %v255
    %v438 = vld [vmem:[%s6] sm:$0xf]
    %v439 = vld [vmem:[%s6 + $0x4] sm:$0xf]
    %v440 = vld [vmem:[%s6 + $0x8] sm:$0xf]
    %v441 = vld [vmem:[%s6 + $0xc] sm:$0xf]
    %v442 = vld [vmem:[%s6 + $0x10] sm:$0xf]
    %v443 = vld [vmem:[%s6 + $0x14] sm:$0xf]
    %v444 = vld [vmem:[%s6 + $0x18] sm:$0xf]
    %v445 = vld [vmem:[%s6 + $0x1c] sm:$0xf]
    %v446 = vld [vmem:[%s6 + $0x20] sm:$0xf]
    %v447 = vld [vmem:[%s6 + $0x24] sm:$0xf]
    %v448 = vld [vmem:[%s6 + $0x28] sm:$0xf]
    %v449 = vld [vmem:[%s6 + $0x2c] sm:$0xf]
    %v450 = vld [vmem:[%s6 + $0x30] sm:$0xf]
    %v451 = vld [vmem:[%s6 + $0x34] sm:$0xf]
    %v452 = vld [vmem:[%s6 + $0x38] sm:$0xf]
    %v453 = vld [vmem:[%s6 + $0x3c] sm:$0xf]
    %v456 = vunpack.c.l.b16 %v436
    %v457 = vunpack.c.l.b16 %v437
    %v458 = vsel %vm282, %v457, %v456
    %v459 = vpack.c.b16 %v458, %v458
    %v477 = vunpack.c.l.b16 %v438
    %v478 = vunpack.c.l.b16 %v439
    %v479 = vunpack.c.l.b16 %v440
    %v480 = vunpack.c.l.b16 %v441
    %v481 = vunpack.c.l.b16 %v442
    %v482 = vunpack.c.l.b16 %v443
    %v483 = vunpack.c.l.b16 %v444
    %v484 = vunpack.c.l.b16 %v445
    %v485 = vunpack.c.l.b16 %v446
    %v486 = vunpack.c.l.b16 %v447
    %v487 = vunpack.c.l.b16 %v448
    %v488 = vunpack.c.l.b16 %v449
    %v489 = vunpack.c.l.b16 %v450
    %v490 = vunpack.c.l.b16 %v451
    %v491 = vunpack.c.l.b16 %v452
    %v492 = vunpack.c.l.b16 %v453
    %v493 = vpack.c.b16 %v478, %v477
    %v494 = vpack.c.b16 %v480, %v479
    %v495 = vpack.c.b16 %v482, %v481
    %v496 = vpack.c.b16 %v484, %v483
    %v497 = vpack.c.b16 %v486, %v485
    %v498 = vpack.c.b16 %v488, %v487
    %v499 = vpack.c.b16 %v490, %v489
    %v500 = vpack.c.b16 %v492, %v491
    %509 = vmatprep.subr.bf16.mxu0 0
    %510 = vmatpush1.bf16.msra.mxu0 %v493
    %511 = vmatprep.subr.bf16.mxu0 0
    %512 = vmatpush1.bf16.msra.mxu0 %v494
    %513 = vmatprep.subr.bf16.mxu0 0
    %514 = vmatpush1.bf16.msra.mxu0 %v495
    %515 = vmatprep.subr.bf16.mxu0 0
    %516 = vmatpush1.bf16.msra.mxu0 %v496
    %517 = vmatprep.subr.bf16.mxu0 0
    %518 = vmatpush1.bf16.msra.mxu0 %v497
    %519 = vmatprep.subr.bf16.mxu0 0
    %520 = vmatpush1.bf16.msra.mxu0 %v498
    %521 = vmatprep.subr.bf16.mxu0 0
    %522 = vmatpush1.bf16.msra.mxu0 %v499
    %523 = vmatprep.subr.bf16.mxu0 0
    %524 = vmatpush1.bf16.msra.mxu0 %v500
    %525 = vmatprep.subr.bf16.mxu0 0
    %526 = vmatpush1.bf16.msra.mxu0 0
    %527 = vmatprep.subr.bf16.mxu0 0
    %528 = vmatpush1.bf16.msra.mxu0 0
    %529 = vmatprep.subr.bf16.mxu0 0
    %530 = vmatpush1.bf16.msra.mxu0 0
    %531 = vmatprep.subr.bf16.mxu0 0
    %532 = vmatpush1.bf16.msra.mxu0 0
    %533 = vmatprep.subr.bf16.mxu0 0
    %534 = vmatpush1.bf16.msra.mxu0 0
    %535 = vmatprep.subr.bf16.mxu0 0
    %536 = vmatpush1.bf16.msra.mxu0 0
    %537 = vmatprep.subr.bf16.mxu0 0
    %538 = vmatpush1.bf16.msra.mxu0 0
    %539 = vmatprep.subr.bf16.mxu0 0
    %540 = vmatpush1.bf16.msra.mxu0 0
    %541 = vmatprep.mubr.bf16.mxu0 0
    %542 = vmatmul.mubr.bf16.gmra.mrb[0].mxu0 %v459
    %v543 = vpop.f32.mrb[0].mxu0
    %v544 = vadd.f32 0.0, %v543
    %v545 = vpop.f32.mrb[0].mxu0
    %v546 = vpop.f32.mrb[0].mxu0
    %v547 = vpop.f32.mrb[0].mxu0
    %548 = vdwg.mxu0
    %v549 = vadd.f32 %v431, %v544
    %v550 = vld [vmem:[%s7] sm:$0x1]
    %v552 = vlaneseq
    %v553 = vshrl.u32 %v552, 7
    %v554 = vsub.s32 0, %v553
    %v555 = vrot.slane %v550, %v554
    %v557 = vadd.f32 %v549, %v555
    %558 = vst [vmem:[#allocation2] sm:$0x3] %v557
    // Predicated region
    $region34: #{_meanmax_head_impl.1} parent=1 // pred_check
      _
    $region35: #{_meanmax_head_impl.1} parent=1 // pred_check_branch
      %560 = sbr.rel (0) target = $region37
    $region36: #{_meanmax_head_impl.1} parent=1 // pred_region
      %s562 = ssub.s32 32, 32
      %563 = vsyncadd [#allocation3], %s562
      %s565 = sshll.u32 [#allocation2], 4
      %s566 = int_to_ptr.vmem [resolvable:$true] %s565
      %568 = dma.vmem_to_hbm [thread:$0]  %s566, 32, %s8, [#allocation3]
    $region37: #{_meanmax_head_impl.1} parent=1 // pred_fallthru
      _
    // Predicated region
    $region38: #{_meanmax_head_impl.1} parent=1 // pred_check
      _
    $region39: #{_meanmax_head_impl.1} parent=1 // pred_check_branch
      %570 = sbr.rel (0) target = $region41
    $region40: #{_meanmax_head_impl.1} parent=1 // pred_region
      %571 = dma.done [#allocation3], 32
    $region41: #{_meanmax_head_impl.1} parent=1 // pred_fallthru
      _
    %572 = vsyncpa [#allocation3], 1

// kernel: _meanmax_head_impl.1
$region0: #{_meanmax_head_impl.1}
  #allocation0 [shape = 'u32[]', space=smem, size = 0x4, offset = 0x4, fixed_abs, tag = 'smem constant byte address 0x4 - core index']
  #allocation1 [shape = 'u32[144,128]{1,0:T(1,128)}', space=vmem, size = 0x12000, scoped, tag = 'internal scratch']
  %s0 = inlined_call_operand.vmem [shape: bf16[2,16,32], index: 0, kind: input, shape index: {}]
  %s1 = inlined_call_operand.vmem [shape: f32[2,16,1], index: 1, kind: input, shape index: {}]
  %s2 = inlined_call_operand.vmem [shape: bf16[32,128], index: 2, kind: input, shape index: {}]
  %s3 = inlined_call_operand.vmem [shape: f32[1,128], index: 3, kind: input, shape index: {}]
  %s4 = inlined_call_operand.vmem [shape: bf16[32,128], index: 4, kind: input, shape index: {}]
  %s5 = inlined_call_operand.vmem [shape: bf16[128,128], index: 5, kind: input, shape index: {}]
  %s6 = inlined_call_operand.vmem [shape: bf16[128,128], index: 6, kind: input, shape index: {}]
  %s7 = inlined_call_operand.vmem [shape: f32[1,128], index: 7, kind: input, shape index: {}]
  %s8 = inlined_call_operand.hbm [shape: f32[2,128], index: 8, kind: output, shape index: {}]
  %s9 = sld [smem:[#allocation0]]
  $region42: #{_meanmax_head_impl.1} parent=0
    _
  %s11 = ssub.s32 1, %s9
  %s12 = scalar_select 0, %s11, %s9
  $region1: #{_meanmax_head_impl.1} parent=0
    #allocation2 [shape = 'u8[1024]{0}', space=vmem, size = 0x400, scoped, tag = 'output window, operand 0, single buffered']
    #allocation3 [shape = 's32[1]{0}', space=sflag, size = 0x4, scoped, tag = 'scoped memory for _meanmax_head_impl.1']
    %13 = vsyncpa [#allocation3], 0
    // Predicated region
    $region2: #{_meanmax_head_impl.1} parent=1 // pred_check
      _
    $region3: #{_meanmax_head_impl.1} parent=1 // pred_check_branch
      %15 = sbr.rel (0) target = $region5
    $region4: #{_meanmax_head_impl.1} parent=1 // pred_region
      _
    $region5: #{_meanmax_head_impl.1} parent=1 // pred_fallthru
      _
    // Predicated region
    $region6: #{_meanmax_head_impl.1} parent=1 // pred_check
      _
    $region7: #{_meanmax_head_impl.1} parent=1 // pred_check_branch
      %17 = sbr.rel (0) target = $region9
    $region8: #{_meanmax_head_impl.1} parent=1 // pred_region
      _
    $region9: #{_meanmax_head_impl.1} parent=1 // pred_fallthru
      _
    // Predicated region
    $region10: #{_meanmax_head_impl.1} parent=1 // pred_check
      _
    $region11: #{_meanmax_head_impl.1} parent=1 // pred_check_branch
      %19 = sbr.rel (0) target = $region13
    $region12: #{_meanmax_head_impl.1} parent=1 // pred_region
      _
    $region13: #{_meanmax_head_impl.1} parent=1 // pred_fallthru
      _
    // Predicated region
    $region14: #{_meanmax_head_impl.1} parent=1 // pred_check
      _
    $region15: #{_meanmax_head_impl.1} parent=1 // pred_check_branch
      %21 = sbr.rel (0) target = $region17
    $region16: #{_meanmax_head_impl.1} parent=1 // pred_region
      _
    $region17: #{_meanmax_head_impl.1} parent=1 // pred_fallthru
      _
    // Predicated region
    $region18: #{_meanmax_head_impl.1} parent=1 // pred_check
      _
    $region19: #{_meanmax_head_impl.1} parent=1 // pred_check_branch
      %23 = sbr.rel (0) target = $region21
    $region20: #{_meanmax_head_impl.1} parent=1 // pred_region
      _
    $region21: #{_meanmax_head_impl.1} parent=1 // pred_fallthru
      _
    // Predicated region
    $region22: #{_meanmax_head_impl.1} parent=1 // pred_check
      _
    $region23: #{_meanmax_head_impl.1} parent=1 // pred_check_branch
      %25 = sbr.rel (0) target = $region25
    $region24: #{_meanmax_head_impl.1} parent=1 // pred_region
      _
    $region25: #{_meanmax_head_impl.1} parent=1 // pred_fallthru
      _
    // Predicated region
    $region26: #{_meanmax_head_impl.1} parent=1 // pred_check
      _
    $region27: #{_meanmax_head_impl.1} parent=1 // pred_check_branch
      %27 = sbr.rel (0) target = $region29
    $region28: #{_meanmax_head_impl.1} parent=1 // pred_region
      _
    $region29: #{_meanmax_head_impl.1} parent=1 // pred_fallthru
      _
    // Predicated region
    $region30: #{_meanmax_head_impl.1} parent=1 // pred_check
      _
    $region31: #{_meanmax_head_impl.1} parent=1 // pred_check_branch
      %29 = sbr.rel (0) target = $region33
    $region32: #{_meanmax_head_impl.1} parent=1 // pred_region
      _
    $region33: #{_meanmax_head_impl.1} parent=1 // pred_fallthru
      _
    %v31 = vld [vmem:[%s0] sm:$0xf]
    %v32 = vld [vmem:[%s0 + $0x4] sm:$0xf]
    %v33 = vld [vmem:[%s0 + $0x8] sm:$0xf]
    %v34 = vld [vmem:[%s0 + $0xc] sm:$0xf]
    %v35 = vlaneseq
    %v36 = vshrl.u32 %v35, 7
    %v37 = vadd.s32 %v36, 8
    %v38 = vld [vmem:[%s1] sm:$0xff]
    %v39 = vld [vmem:[%s1 + $0x8] sm:$0xff]
    %v40 = vld [vmem:[%s1 + $0x10] sm:$0xff]
    %v41 = vld [vmem:[%s1 + $0x18] sm:$0xff]
    %vm42 = vcmp.gt.s32.totalorder %v36, 0
    %vm43 = vcmp.gt.s32.totalorder %v37, 0
    %v44 = vsel %vm42, 1, 0
    %v45 = vsel %vm43, 1, 0
    %v46 = vcvt.s32.f32 %v44
    %v47 = vcvt.s32.f32 %v45
    %v48 = vmul.f32 %v38, %v46
    %v49 = vmul.f32 %v39, %v47
    %v50 = vmul.f32 %v40, %v46
    %v51 = vmul.f32 %v41, %v47
    %v52 = vld [vmem:[%s2] sm:$0xf]
    %v53 = vld [vmem:[%s2 + $0x4] sm:$0xf]
    %v54 = vld [vmem:[%s2 + $0x8] sm:$0xf]
    %v55 = vld [vmem:[%s2 + $0xc] sm:$0xf]
    %v56 = vld [vmem:[%s3] sm:$0x1]
    %v58 = vlaneseq
    %v59 = vshrl.u32 %v58, 7
    %v60 = vsub.s32 0, %v59
    %v61 = vrot.slane %v56, %v60
    %v67 = vunpack.c.l.b16 %v31
    %v68 = vunpack.c.l.b16 %v32
    %v69 = vunpack.c.l.b16 %v33
    %v70 = vunpack.c.l.b16 %v34
    %v71 = vpack.c.b16 %v68, %v67
    %v72 = vpack.c.b16 %v70, %v69
    %v77 = vunpack.c.l.b16 %v52
    %v78 = vunpack.c.l.b16 %v53
    %v79 = vunpack.c.l.b16 %v54
    %v80 = vunpack.c.l.b16 %v55
    %v81 = vpack.c.b16 %v78, %v77
    %v82 = vpack.c.b16 %v80, %v79
    %vm85 = vcmask 261120
    %v87 = vsel %vm85, %v71, 0
    %v90 = vsel %vm85, %v72, 0
    %92 = vmatprep.subr.bf16.mxu0 0
    %93 = vmatpush1.bf16.msra.mxu0 %v81
    %94 = vmatprep.subr.bf16.mxu0 0
    %95 = vmatpush1.bf16.msra.mxu0 %v82
    %96 = vmatprep.subr.bf16.mxu0 0
    %97 = vmatpush1.bf16.msra.mxu0 0
    %98 = vmatprep.subr.bf16.mxu0 0
    %99 = vmatpush1.bf16.msra.mxu0 0
    %100 = vmatprep.subr.bf16.mxu0 0
    %101 = vmatpush1.bf16.msra.mxu0 0
    %102 = vmatprep.subr.bf16.mxu0 0
    %103 = vmatpush1.bf16.msra.mxu0 0
    %104 = vmatprep.subr.bf16.mxu0 0
    %105 = vmatpush1.bf16.msra.mxu0 0
    %106 = vmatprep.subr.bf16.mxu0 0
    %107 = vmatpush1.bf16.msra.mxu0 0
    %108 = vmatprep.subr.bf16.mxu0 0
    %109 = vmatpush1.bf16.msra.mxu0 0
    %110 = vmatprep.subr.bf16.mxu0 0
    %111 = vmatpush1.bf16.msra.mxu0 0
    %112 = vmatprep.subr.bf16.mxu0 0
    %113 = vmatpush1.bf16.msra.mxu0 0
    %114 = vmatprep.subr.bf16.mxu0 0
    %115 = vmatpush1.bf16.msra.mxu0 0
    %116 = vmatprep.subr.bf16.mxu0 0
    %117 = vmatpush1.bf16.msra.mxu0 0
    %118 = vmatprep.subr.bf16.mxu0 0
    %119 = vmatpush1.bf16.msra.mxu0 0
    %120 = vmatprep.subr.bf16.mxu0 0
    %121 = vmatpush1.bf16.msra.mxu0 0
    %122 = vmatprep.subr.bf16.mxu0 0
    %123 = vmatpush1.bf16.msra.mxu0 0
    %124 = vmatprep.mubr.bf16.mxu0 0
    %125 = vmatmul.mubr.bf16.gmra.mrb[0].mxu0 %v87
    %v126 = vpop.f32.mrb[0].mxu0
    %v127 = vadd.f32 %v61, %v126
    %v128 = vpop.f32.mrb[0].mxu0
    %v129 = vpop.f32.mrb[0].mxu0
    %v130 = vadd.f32 %v61, %v129
    %v131 = vpop.f32.mrb[0].mxu0
    %132 = vmatprep.mubr.bf16.mxu0 0
    %133 = vmatmul.mubr.bf16.gmra.mrb[0].mxu0 %v90
    %v134 = vpop.f32.mrb[0].mxu0
    %v135 = vadd.f32 %v61, %v134
    %v136 = vpop.f32.mrb[0].mxu0
    %v137 = vpop.f32.mrb[0].mxu0
    %v138 = vadd.f32 %v61, %v137
    %v139 = vpop.f32.mrb[0].mxu0
    %140 = vdwg.mxu0
    %142 = vset.pattern.permute.xlu0 0
    %143 = vperm.xlu0 %142, %v48
    %v144 = vpop.permute.xlu0 %143
    %147 = vset.pattern.permute.xlu0 0
    %148 = vperm.xlu0 %147, %v49
    %v149 = vpop.permute.xlu0 %148
    %152 = vset.pattern.permute.xlu0 0
    %153 = vperm.xlu0 %152, %v50
    %v154 = vpop.permute.xlu0 %153
    %157 = vset.pattern.permute.xlu0 0
    %158 = vperm.xlu0 %157, %v51
    %v159 = vpop.permute.xlu0 %158
    %v161 = vmul.f32 %v127, %v144
    %v162 = vmul.f32 %v130, %v149
    %v163 = vmul.f32 %v135, %v154
    %v164 = vmul.f32 %v138, %v159
    %v165 = vadd.f32 %v161, %v162
    %v166 = vrot.slane %v165, 4
    %v167 = vadd.f32 %v165, %v166
    %v168 = vrot.slane %v167, 2
    %v169 = vadd.f32 %v167, %v168
    %v170 = vrot.slane %v169, 1
    %v171 = vadd.f32 %v169, %v170
    %v172 = vadd.f32 %v163, %v164
    %v173 = vrot.slane %v172, 4
    %v174 = vadd.f32 %v172, %v173
    %v175 = vrot.slane %v174, 2
    %v176 = vadd.f32 %v174, %v175
    %v177 = vrot.slane %v176, 1
    %v178 = vadd.f32 %v176, %v177
    %vm179 = vcmask 7168
    %v180 = vsel %vm179, %v48, 0.0
    %v181 = vsel %vm179, %v49, 0.0
    %v182 = vadd.f32 %v180, %v181
    %v183 = vrot.slane %v182, 4
    %v184 = vadd.f32 %v182, %v183
    %v185 = vrot.slane %v184, 2
    %v186 = vadd.f32 %v184, %v185
    %v187 = vrot.slane %v186, 1
    %v188 = vadd.f32 %v186, %v187
    %v189 = vsel %vm179, %v50, 0.0
    %v190 = vsel %vm179, %v51, 0.0
    %v191 = vadd.f32 %v189, %v190
    %v192 = vrot.slane %v191, 4
    %v193 = vadd.f32 %v191, %v192
    %v194 = vrot.slane %v193, 2
    %v195 = vadd.f32 %v193, %v194
    %v196 = vrot.slane %v195, 1
    %v197 = vadd.f32 %v195, %v196
    %v198 = vmax.f32 %v188, 1e-09
    %v199 = vmax.f32 %v197, 1e-09
    %201 = vset.pattern.permute.xlu0 0
    %202 = vperm.xlu0 %201, %v198
    %v203 = vpop.permute.xlu0 %202
    %206 = vset.pattern.permute.xlu0 0
    %207 = vperm.xlu0 %206, %v199
    %v208 = vpop.permute.xlu0 %207
    %v210 = vrcp.pop %v203
    %v211 = vmul.f32 %v171, %v210
    %v212 = vrcp.pop %v208
    %v213 = vmul.f32 %v178, %v212
    %vm214 = vcmp.gt.f32.partialorder %v48, 0.0
    %vm215 = vcmp.gt.f32.partialorder %v49, 0.0
    %vm216 = vcmp.gt.f32.partialorder %v50, 0.0
    %vm217 = vcmp.gt.f32.partialorder %v51, 0.0
    %v218 = vsel %vm214, 1, 0
    %v219 = vsel %vm215, 1, 0
    %v220 = vsel %vm216, 1, 0
    %v221 = vsel %vm217, 1, 0
    %222 = vset.pattern.permute.xlu0 0
    %223 = vperm.xlu0 %222, %v218
    %v224 = vpop.permute.xlu0 %223
    %225 = vset.pattern.permute.xlu0 0
    %226 = vperm.xlu0 %225, %v219
    %v227 = vpop.permute.xlu0 %226
    %228 = vset.pattern.permute.xlu0 0
    %229 = vperm.xlu0 %228, %v220
    %v230 = vpop.permute.xlu0 %229
    %231 = vset.pattern.permute.xlu0 0
    %232 = vperm.xlu0 %231, %v221
    %v233 = vpop.permute.xlu0 %232
    %vm234 = vcmp.eq.s32.totalorder %v224, 1
    %vm235 = vcmp.eq.s32.totalorder %v227, 1
    %vm236 = vcmp.eq.s32.totalorder %v230, 1
    %vm237 = vcmp.eq.s32.totalorder %v233, 1
    %v238 = vsel %vm234, %v127, -10000.0
    %v239 = vsel %vm235, %v130, -10000.0
    %v240 = vsel %vm236, %v135, -10000.0
    %v241 = vsel %vm237, %v138, -10000.0
    %v242 = vmax.f32 %v238, %v239
    %v243 = vrot.slane %v242, 4
    %v244 = vmax.f32 %v242, %v243
    %v245 = vrot.slane %v244, 2
    %v246 = vmax.f32 %v244, %v245
    %v247 = vrot.slane %v246, 1
    %v248 = vmax.f32 %v246, %v247
    %v249 = vmax.f32 %v240, %v241
    %v250 = vrot.slane %v249, 4
    %v251 = vmax.f32 %v249, %v250
    %v252 = vrot.slane %v251, 2
    %v253 = vmax.f32 %v251, %v252
    %v254 = vrot.slane %v253, 1
    %v255 = vmax.f32 %v253, %v254
    %v256 = vld [vmem:[%s4] sm:$0xf]
    %v257 = vld [vmem:[%s4 + $0x4] sm:$0xf]
    %v258 = vld [vmem:[%s4 + $0x8] sm:$0xf]
    %v259 = vld [vmem:[%s4 + $0xc] sm:$0xf]
    %v260 = vpack.c.bf16 %v211, %v211
    %v261 = vpack.c.bf16 %v213, %v213
    %v262 = vld [vmem:[%s5] sm:$0xf]
    %v263 = vld [vmem:[%s5 + $0x4] sm:$0xf]
    %v264 = vld [vmem:[%s5 + $0x8] sm:$0xf]
    %v265 = vld [vmem:[%s5 + $0xc] sm:$0xf]
    %v266 = vld [vmem:[%s5 + $0x10] sm:$0xf]
    %v267 = vld [vmem:[%s5 + $0x14] sm:$0xf]
    %v268 = vld [vmem:[%s5 + $0x18] sm:$0xf]
    %v269 = vld [vmem:[%s5 + $0x1c] sm:$0xf]
    %v270 = vld [vmem:[%s5 + $0x20] sm:$0xf]
    %v271 = vld [vmem:[%s5 + $0x24] sm:$0xf]
    %v272 = vld [vmem:[%s5 + $0x28] sm:$0xf]
    %v273 = vld [vmem:[%s5 + $0x2c] sm:$0xf]
    %v274 = vld [vmem:[%s5 + $0x30] sm:$0xf]
    %v275 = vld [vmem:[%s5 + $0x34] sm:$0xf]
    %v276 = vld [vmem:[%s5 + $0x38] sm:$0xf]
    %v277 = vld [vmem:[%s5 + $0x3c] sm:$0xf]
    %v280 = vunpack.c.l.b16 %v260
    %v281 = vunpack.c.l.b16 %v261
    %vm282 = vcmask 1041409
    %v283 = vsel %vm282, %v281, %v280
    %v284 = vpack.c.b16 %v283, %v283
    %v302 = vunpack.c.l.b16 %v262
    %v303 = vunpack.c.l.b16 %v263
    %v304 = vunpack.c.l.b16 %v264
    %v305 = vunpack.c.l.b16 %v265
    %v306 = vunpack.c.l.b16 %v266
    %v307 = vunpack.c.l.b16 %v267
    %v308 = vunpack.c.l.b16 %v268
    %v309 = vunpack.c.l.b16 %v269
    %v310 = vunpack.c.l.b16 %v270
    %v311 = vunpack.c.l.b16 %v271
    %v312 = vunpack.c.l.b16 %v272
    %v313 = vunpack.c.l.b16 %v273
    %v314 = vunpack.c.l.b16 %v274
    %v315 = vunpack.c.l.b16 %v275
    %v316 = vunpack.c.l.b16 %v276
    %v317 = vunpack.c.l.b16 %v277
    %v318 = vpack.c.b16 %v303, %v302
    %v319 = vpack.c.b16 %v305, %v304
    %v320 = vpack.c.b16 %v307, %v306
    %v321 = vpack.c.b16 %v309, %v308
    %v322 = vpack.c.b16 %v311, %v310
    %v323 = vpack.c.b16 %v313, %v312
    %v324 = vpack.c.b16 %v315, %v314
    %v325 = vpack.c.b16 %v317, %v316
    %334 = vmatprep.subr.bf16.mxu0 0
    %335 = vmatpush1.bf16.msra.mxu0 %v318
    %336 = vmatprep.subr.bf16.mxu0 0
    %337 = vmatpush1.bf16.msra.mxu0 %v319
    %338 = vmatprep.subr.bf16.mxu0 0
    %339 = vmatpush1.bf16.msra.mxu0 %v320
    %340 = vmatprep.subr.bf16.mxu0 0
    %341 = vmatpush1.bf16.msra.mxu0 %v321
    %342 = vmatprep.subr.bf16.mxu0 0
    %343 = vmatpush1.bf16.msra.mxu0 %v322
    %344 = vmatprep.subr.bf16.mxu0 0
    %345 = vmatpush1.bf16.msra.mxu0 %v323
    %346 = vmatprep.subr.bf16.mxu0 0
    %347 = vmatpush1.bf16.msra.mxu0 %v324
    %348 = vmatprep.subr.bf16.mxu0 0
    %349 = vmatpush1.bf16.msra.mxu0 %v325
    %350 = vmatprep.subr.bf16.mxu0 0
    %351 = vmatpush1.bf16.msra.mxu0 0
    %352 = vmatprep.subr.bf16.mxu0 0
    %353 = vmatpush1.bf16.msra.mxu0 0
    %354 = vmatprep.subr.bf16.mxu0 0
    %355 = vmatpush1.bf16.msra.mxu0 0
    %356 = vmatprep.subr.bf16.mxu0 0
    %357 = vmatpush1.bf16.msra.mxu0 0
    %358 = vmatprep.subr.bf16.mxu0 0
    %359 = vmatpush1.bf16.msra.mxu0 0
    %360 = vmatprep.subr.bf16.mxu0 0
    %361 = vmatpush1.bf16.msra.mxu0 0
    %362 = vmatprep.subr.bf16.mxu0 0
    %363 = vmatpush1.bf16.msra.mxu0 0
    %364 = vmatprep.subr.bf16.mxu0 0
    %365 = vmatpush1.bf16.msra.mxu0 0
    %366 = vmatprep.mubr.bf16.mxu0 0
    %367 = vmatmul.mubr.bf16.gmra.mrb[0].mxu0 %v284
    %v368 = vpop.f32.mrb[0].mxu0
    %v369 = vadd.f32 0.0, %v368
    %v370 = vpop.f32.mrb[0].mxu0
    %v371 = vpop.f32.mrb[0].mxu0
    %v372 = vpop.f32.mrb[0].mxu0
    %373 = vdwg.mxu0
    %v374 = vpack.c.b16 %v67, %v67
    %v375 = vpack.c.b16 %v69, %v69
    %v376 = vunpack.c.l.b16 %v374
    %v377 = vunpack.c.l.b16 %v375
    %v378 = vrot.slane %v377, 7
    %v379 = vsel %vm282, %v378, %v376
    %v380 = vpack.c.b16 %v379, %v379
    %v385 = vunpack.c.l.b16 %v256
    %v386 = vunpack.c.l.b16 %v257
    %v387 = vunpack.c.l.b16 %v258
    %v388 = vunpack.c.l.b16 %v259
    %v389 = vpack.c.b16 %v386, %v385
    %v390 = vpack.c.b16 %v388, %v387
    %v394 = vsel %vm85, %v380, 0
    %396 = vmatprep.subr.bf16.mxu0 0
    %397 = vmatpush1.bf16.msra.mxu0 %v389
    %398 = vmatprep.subr.bf16.mxu0 0
    %399 = vmatpush1.bf16.msra.mxu0 %v390
    %400 = vmatprep.subr.bf16.mxu0 0
    %401 = vmatpush1.bf16.msra.mxu0 0
    %402 = vmatprep.subr.bf16.mxu0 0
    %403 = vmatpush1.bf16.msra.mxu0 0
    %404 = vmatprep.subr.bf16.mxu0 0
    %405 = vmatpush1.bf16.msra.mxu0 0
    %406 = vmatprep.subr.bf16.mxu0 0
    %407 = vmatpush1.bf16.msra.mxu0 0
    %408 = vmatprep.subr.bf16.mxu0 0
    %409 = vmatpush1.bf16.msra.mxu0 0
    %410 = vmatprep.subr.bf16.mxu0 0
    %411 = vmatpush1.bf16.msra.mxu0 0
    %412 = vmatprep.subr.bf16.mxu0 0
    %413 = vmatpush1.bf16.msra.mxu0 0
    %414 = vmatprep.subr.bf16.mxu0 0
    %415 = vmatpush1.bf16.msra.mxu0 0
    %416 = vmatprep.subr.bf16.mxu0 0
    %417 = vmatpush1.bf16.msra.mxu0 0
    %418 = vmatprep.subr.bf16.mxu0 0
    %419 = vmatpush1.bf16.msra.mxu0 0
    %420 = vmatprep.subr.bf16.mxu0 0
    %421 = vmatpush1.bf16.msra.mxu0 0
    %422 = vmatprep.subr.bf16.mxu0 0
    %423 = vmatpush1.bf16.msra.mxu0 0
    %424 = vmatprep.subr.bf16.mxu0 0
    %425 = vmatpush1.bf16.msra.mxu0 0
    %426 = vmatprep.subr.bf16.mxu0 0
    %427 = vmatpush1.bf16.msra.mxu0 0
    %428 = vmatprep.mubr.bf16.mxu0 0
    %429 = vmatmul.mubr.bf16.gmra.mrb[0].mxu0 %v394
    %v430 = vpop.f32.mrb[0].mxu0
    %v431 = vadd.f32 %v369, %v430
    %v432 = vpop.f32.mrb[0].mxu0
    %v433 = vpop.f32.mrb[0].mxu0
    %v434 = vpop.f32.mrb[0].mxu0
    %435 = vdwg.mxu0
    %v436 = vpack.c.bf16 %v248, %v248
    %v437 = vpack.c.bf16 %v255, %v255
    %v438 = vld [vmem:[%s6] sm:$0xf]
    %v439 = vld [vmem:[%s6 + $0x4] sm:$0xf]
    %v440 = vld [vmem:[%s6 + $0x8] sm:$0xf]
    %v441 = vld [vmem:[%s6 + $0xc] sm:$0xf]
    %v442 = vld [vmem:[%s6 + $0x10] sm:$0xf]
    %v443 = vld [vmem:[%s6 + $0x14] sm:$0xf]
    %v444 = vld [vmem:[%s6 + $0x18] sm:$0xf]
    %v445 = vld [vmem:[%s6 + $0x1c] sm:$0xf]
    %v446 = vld [vmem:[%s6 + $0x20] sm:$0xf]
    %v447 = vld [vmem:[%s6 + $0x24] sm:$0xf]
    %v448 = vld [vmem:[%s6 + $0x28] sm:$0xf]
    %v449 = vld [vmem:[%s6 + $0x2c] sm:$0xf]
    %v450 = vld [vmem:[%s6 + $0x30] sm:$0xf]
    %v451 = vld [vmem:[%s6 + $0x34] sm:$0xf]
    %v452 = vld [vmem:[%s6 + $0x38] sm:$0xf]
    %v453 = vld [vmem:[%s6 + $0x3c] sm:$0xf]
    %v456 = vunpack.c.l.b16 %v436
    %v457 = vunpack.c.l.b16 %v437
    %v458 = vsel %vm282, %v457, %v456
    %v459 = vpack.c.b16 %v458, %v458
    %v477 = vunpack.c.l.b16 %v438
    %v478 = vunpack.c.l.b16 %v439
    %v479 = vunpack.c.l.b16 %v440
    %v480 = vunpack.c.l.b16 %v441
    %v481 = vunpack.c.l.b16 %v442
    %v482 = vunpack.c.l.b16 %v443
    %v483 = vunpack.c.l.b16 %v444
    %v484 = vunpack.c.l.b16 %v445
    %v485 = vunpack.c.l.b16 %v446
    %v486 = vunpack.c.l.b16 %v447
    %v487 = vunpack.c.l.b16 %v448
    %v488 = vunpack.c.l.b16 %v449
    %v489 = vunpack.c.l.b16 %v450
    %v490 = vunpack.c.l.b16 %v451
    %v491 = vunpack.c.l.b16 %v452
    %v492 = vunpack.c.l.b16 %v453
    %v493 = vpack.c.b16 %v478, %v477
    %v494 = vpack.c.b16 %v480, %v479
    %v495 = vpack.c.b16 %v482, %v481
    %v496 = vpack.c.b16 %v484, %v483
    %v497 = vpack.c.b16 %v486, %v485
    %v498 = vpack.c.b16 %v488, %v487
    %v499 = vpack.c.b16 %v490, %v489
    %v500 = vpack.c.b16 %v492, %v491
    %509 = vmatprep.subr.bf16.mxu0 0
    %510 = vmatpush1.bf16.msra.mxu0 %v493
    %511 = vmatprep.subr.bf16.mxu0 0
    %512 = vmatpush1.bf16.msra.mxu0 %v494
    %513 = vmatprep.subr.bf16.mxu0 0
    %514 = vmatpush1.bf16.msra.mxu0 %v495
    %515 = vmatprep.subr.bf16.mxu0 0
    %516 = vmatpush1.bf16.msra.mxu0 %v496
    %517 = vmatprep.subr.bf16.mxu0 0
    %518 = vmatpush1.bf16.msra.mxu0 %v497
    %519 = vmatprep.subr.bf16.mxu0 0
    %520 = vmatpush1.bf16.msra.mxu0 %v498
    %521 = vmatprep.subr.bf16.mxu0 0
    %522 = vmatpush1.bf16.msra.mxu0 %v499
    %523 = vmatprep.subr.bf16.mxu0 0
    %524 = vmatpush1.bf16.msra.mxu0 %v500
    %525 = vmatprep.subr.bf16.mxu0 0
    %526 = vmatpush1.bf16.msra.mxu0 0
    %527 = vmatprep.subr.bf16.mxu0 0
    %528 = vmatpush1.bf16.msra.mxu0 0
    %529 = vmatprep.subr.bf16.mxu0 0
    %530 = vmatpush1.bf16.msra.mxu0 0
    %531 = vmatprep.subr.bf16.mxu0 0
    %532 = vmatpush1.bf16.msra.mxu0 0
    %533 = vmatprep.subr.bf16.mxu0 0
    %534 = vmatpush1.bf16.msra.mxu0 0
    %535 = vmatprep.subr.bf16.mxu0 0
    %536 = vmatpush1.bf16.msra.mxu0 0
    %537 = vmatprep.subr.bf16.mxu0 0
    %538 = vmatpush1.bf16.msra.mxu0 0
    %539 = vmatprep.subr.bf16.mxu0 0
    %540 = vmatpush1.bf16.msra.mxu0 0
    %541 = vmatprep.mubr.bf16.mxu0 0
    %542 = vmatmul.mubr.bf16.gmra.mrb[0].mxu0 %v459
    %v543 = vpop.f32.mrb[0].mxu0
    %v544 = vadd.f32 0.0, %v543
    %v545 = vpop.f32.mrb[0].mxu0
    %v546 = vpop.f32.mrb[0].mxu0
    %v547 = vpop.f32.mrb[0].mxu0
    %548 = vdwg.mxu0
    %v549 = vadd.f32 %v431, %v544
    %v550 = vld [vmem:[%s7] sm:$0x1]
    %v552 = vlaneseq
    %v553 = vshrl.u32 %v552, 7
    %v554 = vsub.s32 0, %v553
    %v555 = vrot.slane %v550, %v554
    %v557 = vadd.f32 %v549, %v555
    %558 = vst [vmem:[#allocation2] sm:$0x3] %v557
    // Predicated region
    $region34: #{_meanmax_head_impl.1} parent=1 // pred_check
      _
    $region35: #{_meanmax_head_impl.1} parent=1 // pred_check_branch
      %560 = sbr.rel (0) target = $region37
    $region36: #{_meanmax_head_impl.1} parent=1 // pred_region
      %s562 = ssub.s32 32, 32
      %563 = vsyncadd [#allocation3], %s562
      %s565 = sshll.u32 [#allocation2], 4
      %s566 = int_to_ptr.vmem [resolvable:$true] %s565
      %568 = dma.vmem_to_hbm [thread:$0]  %s566, 32, %s8, [#allocation3]
    $region37: #{_meanmax_head_impl.1} parent=1 // pred_fallthru
      _
    // Predicated region
    $region38: #{_meanmax_head_impl.1} parent=1 // pred_check
      _
    $region39: #{_meanmax_head_impl.1} parent=1 // pred_check_branch
      %570 = sbr.rel (0) target = $region41
    $region40: #{_meanmax_head_impl.1} parent=1 // pred_region
      %571 = dma.done [#allocation3], 32
    $region41: #{_meanmax_head_impl.1} parent=1 // pred_fallthru
      _
    %572 = vsyncpa [#allocation3], 1

</llo_original>
